<compile_context>
chip_gen: v7x
topology: tpu7x:2x2x1
jax: 0.10.0
libtpu: 0.0.40
codegen_flags: <defaults>
</compile_context>

<pallas_src>
import functools
import math

import jax
import jax.numpy as jnp
from jax.experimental import pallas as pl
from jax.experimental.pallas import tpu as pltpu


def attention_agg_kernel(e1_ref, e2_ref, wqkv_ref, bqkv_ref, o_ref,
                         *, scale, emb_dim):
    E = emb_dim

    e1 = e1_ref[...]
    e2 = e2_ref[...]
    wqkv = wqkv_ref[...]
    bqkv = bqkv_ref[...].astype(jnp.float32)

    # Fused QKV projection: one (block_m, E) x (E, 3E) matmul per position,
    # f32 accumulation on the MXU, post-matmul math in f32.
    qkv1 = jnp.dot(e1, wqkv, preferred_element_type=jnp.float32) + bqkv
    qkv2 = jnp.dot(e2, wqkv, preferred_element_type=jnp.float32) + bqkv

    # Static slices at lane offsets 0, E, 2E (multiples of 128 -> layout-free).
    q1, k1, v1 = qkv1[:, :E], qkv1[:, E:2 * E], qkv1[:, 2 * E:]
    q2, k2, v2 = qkv2[:, :E], qkv2[:, E:2 * E], qkv2[:, 2 * E:]

    # 2x2 attention scores per batch row: s_ij = <q_i, k_j> / sqrt(E)
    s11 = jnp.sum(q1 * k1, axis=-1, keepdims=True) * scale
    s12 = jnp.sum(q1 * k2, axis=-1, keepdims=True) * scale
    s21 = jnp.sum(q2 * k1, axis=-1, keepdims=True) * scale
    s22 = jnp.sum(q2 * k2, axis=-1, keepdims=True) * scale

    # Length-2 softmax == sigmoid of the score difference (exact identity).
    a11 = jax.nn.sigmoid(s11 - s12)
    a12 = 1.0 - a11
    a21 = jax.nn.sigmoid(s21 - s22)
    a22 = 1.0 - a21

    # (attn @ v).sum(dim=1) == (a11 + a21) * v1 + (a12 + a22) * v2
    out = (a11 + a21) * v1 + (a12 + a22) * v2
    o_ref[...] = out.astype(o_ref.dtype)


def attention_aggregation(emb1, emb2, wq, wk, wv, bq, bk, bv, *, block_m=256):
    """emb1, emb2: (B, E).  wq/wk/wv: (E, E) pre-transposed so y = x @ W + b.
    bq/bk/bv: (1, E)."""
    B, E = emb1.shape

    # Clamp the batch tile to the problem size; keep it a multiple of 8
    # sublanes (16 if you switch to bf16 inputs).
    block_m = min(block_m, B)
    assert B % block_m == 0, "B must be a multiple of block_m"
    assert block_m % 8 == 0, "block_m must be a multiple of 8 sublanes"

    # Fuse the three projections into one (E, 3E) weight / (1, 3E) bias so the
    # kernel issues 2 MXU matmuls per tile instead of 6 and the wider RHS
    # (3E = 384 lanes) better fills the 256-wide MXU on v6e/v7x.
    wqkv = jnp.concatenate([wq, wk, wv], axis=1)   # (E, 3E)
    bqkv = jnp.concatenate([bq, bk, bv], axis=1)   # (1, 3E)

    scale = 1.0 / math.sqrt(E)
    kernel = functools.partial(attention_agg_kernel, scale=scale, emb_dim=E)

    grid = (B // block_m,)
    emb_spec = pl.BlockSpec((block_m, E), lambda i: (i, 0))
    w_spec = pl.BlockSpec((E, 3 * E), lambda i: (0, 0))
    b_spec = pl.BlockSpec((1, 3 * E), lambda i: (0, 0))

    return pl.pallas_call(
        kernel,
        out_shape=jax.ShapeDtypeStruct((B, E), emb1.dtype),
        grid_spec=pltpu.PrefetchScalarGridSpec(
            num_scalar_prefetch=0,
            grid=grid,
            in_specs=[emb_spec, emb_spec, w_spec, b_spec],
            out_specs=pl.BlockSpec((block_m, E), lambda i: (i, 0)),
        ),
        compiler_params=pltpu.CompilerParams(
            dimension_semantics=("parallel",)),
    )(emb1, emb2, wqkv, bqkv)


def reference(emb1, emb2, wq, wk, wv, bq, bk, bv):
    """Pure-JAX replication of the PyTorch forward for verification."""
    E = emb1.shape[-1]
    embs = jnp.stack([emb1, emb2], axis=1)                     # (B, 2, E)
    q = embs @ wq + bq
    k = embs @ wk + bk
    v = embs @ wv + bv
    scores = jnp.einsum('bqe,bke->bqk', q, k) / math.sqrt(E)   # (B, 2, 2)
    attn = jax.nn.softmax(scores, axis=-1)
    return jnp.einsum('bqk,bke->bqe', attn, v).sum(axis=1)     # (B, E)


if __name__ == "__main__":
    # Small-but-aligned demo shapes: E = 128 (one lane tile), B = 512 so that
    # block_m = 256 gives a 2-step "parallel" grid (>= 1 step per TC on v7x).
    B, E = 512, 128
    key = jax.random.PRNGKey(0)
    k1, k2, k3, k4, k5, k6, k7, k8 = jax.random.split(key, 8)

    emb1 = jax.random.normal(k1, (B, E), dtype=jnp.float32)
    emb2 = jax.random.normal(k2, (B, E), dtype=jnp.float32)

    # nn.Linear default init: U(-1/sqrt(fan_in), 1/sqrt(fan_in)).
    # Weights are stored pre-transposed (in, out) so the kernel does y = x @ W + b.
    bound = 1.0 / math.sqrt(E)
    wq = jax.random.uniform(k3, (E, E), jnp.float32, -bound, bound)
    wk = jax.random.uniform(k4, (E, E), jnp.float32, -bound, bound)
    wv = jax.random.uniform(k5, (E, E), jnp.float32, -bound, bound)
    bq = jax.random.uniform(k6, (1, E), jnp.float32, -bound, bound)
    bk = jax.random.uniform(k7, (1, E), jnp.float32, -bound, bound)
    bv = jax.random.uniform(k8, (1, E), jnp.float32, -bound, bound)

    out = attention_aggregation(emb1, emb2, wq, wk, wv, bq, bk, bv)
    out = jax.block_until_ready(out)

    ref = jax.block_until_ready(reference(emb1, emb2, wq, wk, wv, bq, bk, bv))
    assert out.shape == (B, E)
    assert jnp.allclose(out, ref, atol=1e-4, rtol=1e-4)

    print("KERNEL_OK")
</pallas_src>

<mosaic_0001>
module attributes {stable_mosaic.version = 11 : i64} {
  func.func @attention_agg_kernel(%arg0: i32, %arg1: memref<256x128xf32, #tpu.memory_space<vmem>>, %arg2: memref<256x128xf32, #tpu.memory_space<vmem>>, %arg3: memref<128x384xf32, #tpu.memory_space<vmem>>, %arg4: memref<1x384xf32, #tpu.memory_space<vmem>>, %arg5: memref<256x128xf32, #tpu.memory_space<vmem>>) attributes {dimension_semantics = [#tpu.dimension_semantics<parallel>], iteration_bounds = array<i64: 2>, scalar_prefetch = 0 : i64, scratch_operands = 0 : i64, tpu.core_type = #tpu.core_type<tc>, window_params = [{transform_indices = @transform_0, window_bounds = array<i64: 256, 128>}, {transform_indices = @transform_1, window_bounds = array<i64: 256, 128>}, {pipeline_mode = #tpu.pipeline_mode<synchronous>, transform_indices = @transform_2, window_bounds = array<i64: 128, 384>}, {pipeline_mode = #tpu.pipeline_mode<synchronous>, transform_indices = @transform_3, window_bounds = array<i64: 1, 384>}, {transform_indices = @transform_4, window_bounds = array<i64: 256, 128>}]} {
    %c0 = arith.constant 0 : index
    %c0_0 = arith.constant 0 : index
    %0 = vector.load %arg1[%c0, %c0_0] : memref<256x128xf32, #tpu.memory_space<vmem>>, vector<256x128xf32>
    %c0_1 = arith.constant 0 : index
    %c0_2 = arith.constant 0 : index
    %1 = vector.load %arg2[%c0_1, %c0_2] : memref<256x128xf32, #tpu.memory_space<vmem>>, vector<256x128xf32>
    %c0_3 = arith.constant 0 : index
    %c0_4 = arith.constant 0 : index
    %2 = vector.load %arg3[%c0_3, %c0_4] : memref<128x384xf32, #tpu.memory_space<vmem>>, vector<128x384xf32>
    %c0_5 = arith.constant 0 : index
    %c0_6 = arith.constant 0 : index
    %3 = vector.load %arg4[%c0_5, %c0_6] : memref<1x384xf32, #tpu.memory_space<vmem>>, vector<1x384xf32>
    %cst = arith.constant dense<0.000000e+00> : vector<256x384xf32>
    %4 = tpu.matmul %0, %2, %cst {dimension_numbers = #tpu.dot_dimension_numbers<[1], [0], [0], [1], [0, 0, 1, 1], [], []>} : vector<256x128xf32>, vector<128x384xf32>, vector<256x384xf32> -> vector<256x384xf32>
    %5 = vector.broadcast %3 : vector<1x384xf32> to vector<256x384xf32>
    %6 = arith.addf %4, %5 : vector<256x384xf32>
    %cst_7 = arith.constant dense<0.000000e+00> : vector<256x384xf32>
    %7 = tpu.matmul %1, %2, %cst_7 {dimension_numbers = #tpu.dot_dimension_numbers<[1], [0], [0], [1], [0, 0, 1, 1], [], []>} : vector<256x128xf32>, vector<128x384xf32>, vector<256x384xf32> -> vector<256x384xf32>
    %8 = vector.broadcast %3 : vector<1x384xf32> to vector<256x384xf32>
    %9 = arith.addf %7, %8 : vector<256x384xf32>
    %10 = vector.extract_strided_slice %6 {offsets = [0, 0], sizes = [256, 128], strides = [1, 1]} : vector<256x384xf32> to vector<256x128xf32>
    %11 = vector.extract_strided_slice %6 {offsets = [0, 128], sizes = [256, 128], strides = [1, 1]} : vector<256x384xf32> to vector<256x128xf32>
    %12 = vector.extract_strided_slice %6 {offsets = [0, 256], sizes = [256, 128], strides = [1, 1]} : vector<256x384xf32> to vector<256x128xf32>
    %13 = vector.extract_strided_slice %9 {offsets = [0, 0], sizes = [256, 128], strides = [1, 1]} : vector<256x384xf32> to vector<256x128xf32>
    %14 = vector.extract_strided_slice %9 {offsets = [0, 128], sizes = [256, 128], strides = [1, 1]} : vector<256x384xf32> to vector<256x128xf32>
    %15 = vector.extract_strided_slice %9 {offsets = [0, 256], sizes = [256, 128], strides = [1, 1]} : vector<256x384xf32> to vector<256x128xf32>
    %16 = arith.mulf %10, %11 : vector<256x128xf32>
    %cst_8 = arith.constant dense<0.000000e+00> : vector<256xf32>
    %17 = vector.multi_reduction <add>, %16, %cst_8 [1] : vector<256x128xf32> to vector<256xf32>
    %18 = vector.shape_cast %17 : vector<256xf32> to vector<256x1xf32>
    %cst_9 = arith.constant 0.0883883461 : f32
    %19 = vector.broadcast %cst_9 : f32 to vector<256x1xf32>
    %20 = arith.mulf %18, %19 : vector<256x1xf32>
    %21 = arith.mulf %10, %14 : vector<256x128xf32>
    %cst_10 = arith.constant dense<0.000000e+00> : vector<256xf32>
    %22 = vector.multi_reduction <add>, %21, %cst_10 [1] : vector<256x128xf32> to vector<256xf32>
    %23 = vector.shape_cast %22 : vector<256xf32> to vector<256x1xf32>
    %cst_11 = arith.constant 0.0883883461 : f32
    %24 = vector.broadcast %cst_11 : f32 to vector<256x1xf32>
    %25 = arith.mulf %23, %24 : vector<256x1xf32>
    %26 = arith.mulf %13, %11 : vector<256x128xf32>
    %cst_12 = arith.constant dense<0.000000e+00> : vector<256xf32>
    %27 = vector.multi_reduction <add>, %26, %cst_12 [1] : vector<256x128xf32> to vector<256xf32>
    %28 = vector.shape_cast %27 : vector<256xf32> to vector<256x1xf32>
    %cst_13 = arith.constant 0.0883883461 : f32
    %29 = vector.broadcast %cst_13 : f32 to vector<256x1xf32>
    %30 = arith.mulf %28, %29 : vector<256x1xf32>
    %31 = arith.mulf %13, %14 : vector<256x128xf32>
    %cst_14 = arith.constant dense<0.000000e+00> : vector<256xf32>
    %32 = vector.multi_reduction <add>, %31, %cst_14 [1] : vector<256x128xf32> to vector<256xf32>
    %33 = vector.shape_cast %32 : vector<256xf32> to vector<256x1xf32>
    %cst_15 = arith.constant 0.0883883461 : f32
    %34 = vector.broadcast %cst_15 : f32 to vector<256x1xf32>
    %35 = arith.mulf %33, %34 : vector<256x1xf32>
    %36 = arith.subf %20, %25 : vector<256x1xf32>
    %37 = arith.negf %36 : vector<256x1xf32>
    %38 = math.exp %37 : vector<256x1xf32>
    %cst_16 = arith.constant 1.000000e+00 : f32
    %39 = vector.broadcast %cst_16 : f32 to vector<256x1xf32>
    %40 = arith.addf %39, %38 : vector<256x1xf32>
    %41 = arith.divf %39, %40 : vector<256x1xf32>
    %cst_17 = arith.constant 1.000000e+00 : f32
    %42 = vector.broadcast %cst_17 : f32 to vector<256x1xf32>
    %43 = arith.subf %42, %41 : vector<256x1xf32>
    %44 = arith.subf %30, %35 : vector<256x1xf32>
    %45 = arith.negf %44 : vector<256x1xf32>
    %46 = math.exp %45 : vector<256x1xf32>
    %cst_18 = arith.constant 1.000000e+00 : f32
    %47 = vector.broadcast %cst_18 : f32 to vector<256x1xf32>
    %48 = arith.addf %47, %46 : vector<256x1xf32>
    %49 = arith.divf %47, %48 : vector<256x1xf32>
    %cst_19 = arith.constant 1.000000e+00 : f32
    %50 = vector.broadcast %cst_19 : f32 to vector<256x1xf32>
    %51 = arith.subf %50, %49 : vector<256x1xf32>
    %52 = arith.addf %41, %49 : vector<256x1xf32>
    %53 = vector.broadcast %52 : vector<256x1xf32> to vector<256x128xf32>
    %54 = arith.mulf %53, %12 : vector<256x128xf32>
    %55 = arith.addf %43, %51 : vector<256x1xf32>
    %56 = vector.broadcast %55 : vector<256x1xf32> to vector<256x128xf32>
    %57 = arith.mulf %56, %15 : vector<256x128xf32>
    %58 = arith.addf %54, %57 : vector<256x128xf32>
    %c0_20 = arith.constant 0 : index
    %c0_21 = arith.constant 0 : index
    %59 = vector.load %arg5[%c0_20, %c0_21] : memref<256x128xf32, #tpu.memory_space<vmem>>, vector<256x128xf32>
    tpu.vector_store %arg5[%c0_20, %c0_21], %58 {strides = array<i32>} : memref<256x128xf32, #tpu.memory_space<vmem>>, vector<256x128xf32>,
    return
  }
  func.func @transform_0(%arg0: i32) -> (i32, i32) {
    %c0_i32 = arith.constant 0 : i32
    %c0_i32_0 = arith.constant 0 : i32
    return %arg0, %c0_i32 : i32, i32
  }
  func.func @transform_1(%arg0: i32) -> (i32, i32) {
    %c0_i32 = arith.constant 0 : i32
    %c0_i32_0 = arith.constant 0 : i32
    return %arg0, %c0_i32 : i32, i32
  }
  func.func @transform_2(%arg0: i32) -> (i32, i32) {
    %c0_i32 = arith.constant 0 : i32
    %c0_i32_0 = arith.constant 0 : i32
    %c0_i32_1 = arith.constant 0 : i32
    return %c0_i32, %c0_i32_0 : i32, i32
  }
  func.func @transform_3(%arg0: i32) -> (i32, i32) {
    %c0_i32 = arith.constant 0 : i32
    %c0_i32_0 = arith.constant 0 : i32
    %c0_i32_1 = arith.constant 0 : i32
    return %c0_i32, %c0_i32_0 : i32, i32
  }
  func.func @transform_4(%arg0: i32) -> (i32, i32) {
    %c0_i32 = arith.constant 0 : i32
    %c0_i32_0 = arith.constant 0 : i32
    return %arg0, %c0_i32 : i32, i32
  }
}

</mosaic_0001>

<llo_original>
// kernel: tpu_custom_call.1
$region0: #{tpu_custom_call.1}
  #allocation0 [shape = 'u32[]', space=smem, size = 0x4, offset = 0x4, fixed_abs, tag = 'smem constant byte address 0x4 - core index']
  #allocation1 [shape = 'u32[144,128]{1,0:T(1,128)}', space=vmem, size = 0x12000, scoped, tag = 'internal scratch']
  %s0 = inlined_call_operand.hbm [shape: f32[512,128], index: 0, kind: input, shape index: {}]
  %s1 = inlined_call_operand.hbm [shape: f32[512,128], index: 1, kind: input, shape index: {}]
  %s2 = inlined_call_operand.hbm [shape: f32[128,384], index: 2, kind: input, shape index: {}]
  %s3 = inlined_call_operand.vmem [shape: f32[1,384], index: 3, kind: input, shape index: {}]
  %s4 = inlined_call_operand.hbm [shape: f32[512,128], index: 4, kind: output, shape index: {}]
  %s5 = sld [smem:[#allocation0]]
  $region61: #{tpu_custom_call.1} parent=0
    _
  %s7 = ssub.s32 1, %s5
  %s8 = scalar_select 0, %s7, %s5
  $region1: #{tpu_custom_call.1} parent=0
    #allocation2 [shape = 'u8[262144]{0}', space=vmem, size = 0x40000, scoped, tag = 'input window, operand 0']
    #allocation3 [shape = 's32[2]{0}', space=sflag, size = 0x8, scoped, tag = 'scoped memory for tpu_custom_call.1']
    #allocation4 [shape = 's32[2]{0}', space=sflag, size = 0x8, scoped, tag = 'scoped memory for tpu_custom_call.1']
    #allocation5 [shape = 'u8[262144]{0}', space=vmem, size = 0x40000, scoped, tag = 'input window, operand 1']
    #allocation6 [shape = 's32[2]{0}', space=sflag, size = 0x8, scoped, tag = 'scoped memory for tpu_custom_call.1']
    #allocation7 [shape = 'u8[196608]{0}', space=vmem, size = 0x30000, scoped, tag = 'input window, operand 2, single buffered']
    #allocation8 [shape = 'u8[262144]{0}', space=vmem, size = 0x40000, scoped, tag = 'output window, operand 0']
    %9 = vsyncpa [#allocation3], 0
    %s10 = scalar_lea.sflag [#allocation3], 1
    %11 = vsyncpa %s10, 0
    %12 = vsyncpa [#allocation6], 0
    %s13 = scalar_lea.sflag [#allocation6], 1
    %14 = vsyncpa %s13, 0
    %15 = vsyncpa [#allocation4], 0
    %s16 = scalar_lea.sflag [#allocation4], 1
    %17 = vsyncpa %s16, 0
    loop: start=0, step=1, limit=4
    $region2: #{tpu_custom_call.1} parent=1 // loop_pre_header
      _
    $region3: #{tpu_custom_call.1} parent=1 // loop_header
      %s19 = sphi 0, %s23
      %p20 = scmp.ge.s32.totalorder %s19, 4
      %s29 = sphi 0, %s31
      %s32 = sphi 0, %s29
      %s33 = sphi 0, %s32
      %s49 = sphi 0, %s33
      %s55 = sphi 0, %s57
      %s58 = sphi 0, %s55
      %s59 = sphi 0, %s58
      %s75 = sphi 0, %s59
      %s79 = sphi 0, %s79
      %s81 = sphi 0, %s79
      %s82 = sphi 0, %s81
      %s96 = sphi 0, %s82
      %s100 = sphi 0, %s100
      %s102 = sphi 0, %s100
      %s103 = sphi 0, %s102
      %s117 = sphi 0, %s103
      %s123 = sphi 0, %s125
      %s126 = sphi 0, %s123
      %s127 = sphi 0, %s126
      %s143 = sphi 0, %s127
    $region4: #{tpu_custom_call.1} parent=1 // loop_header_branch
      %22 = sbr.rel (%p20) target = $region8
    $region5: #{tpu_custom_call.1} parent=1 // loop_body
      %s24 = ssub.s32 %s19, 1
      %s25 = ssub.s32 %s19, 2
      %s26 = sadd.s32 %s19, 1
      %s27 = ssub.s32 %s19, %s26
      %p28 = scmp.eq.s32.totalorder %s27, 0
      %s30 = sadd.s32 %s29, 1
      %s31 = scalar_select %p28, %s29, %s30
      %p34 = pneg %p28
      %p35 = scmp.eq.s32.totalorder %s19, 1
      %p36 = por %p34, %p35
      %p37 = scmp.ne.s32.totalorder %s29, %s32
      %p38 = scmp.eq.s32.totalorder %s19, 0
      %p39 = por %p37, %p38
      %p40 = scmp.ne.s32.totalorder %s29, %s32
      %p41 = scmp.eq.s32.totalorder %s24, 1
      %p42 = por %p40, %p41
      %p43 = scmp.ne.s32.totalorder %s32, %s33
      %p44 = scmp.eq.s32.totalorder %s24, 0
      %p45 = por %p43, %p44
      %p46 = scmp.ne.s32.totalorder %s32, %s33
      %p47 = scmp.eq.s32.totalorder %s25, 1
      %p48 = por %p46, %p47
      %p50 = scmp.ne.s32.totalorder %s33, %s49
      %p51 = scmp.eq.s32.totalorder %s25, 0
      %p52 = por %p50, %p51
      %s53 = ssub.s32 %s19, %s26
      %p54 = scmp.eq.s32.totalorder %s53, 0
      %s56 = sadd.s32 %s55, 1
      %s57 = scalar_select %p54, %s55, %s56
      %p60 = pneg %p54
      %p61 = scmp.eq.s32.totalorder %s19, 1
      %p62 = por %p60, %p61
      %p63 = scmp.ne.s32.totalorder %s55, %s58
      %p64 = scmp.eq.s32.totalorder %s19, 0
      %p65 = por %p63, %p64
      %p66 = scmp.ne.s32.totalorder %s55, %s58
      %p67 = scmp.eq.s32.totalorder %s24, 1
      %p68 = por %p66, %p67
      %p69 = scmp.ne.s32.totalorder %s58, %s59
      %p70 = scmp.eq.s32.totalorder %s24, 0
      %p71 = por %p69, %p70
      %p72 = scmp.ne.s32.totalorder %s58, %s59
      %p73 = scmp.eq.s32.totalorder %s25, 1
      %p74 = por %p72, %p73
      %p76 = scmp.ne.s32.totalorder %s59, %s75
      %p77 = scmp.eq.s32.totalorder %s25, 0
      %p78 = por %p76, %p77
      %s80 = sadd.s32 %s79, 1
      %p83 = scmp.eq.s32.totalorder %s19, 1
      %p84 = scmp.ne.s32.totalorder %s79, %s81
      %p85 = scmp.eq.s32.totalorder %s19, 0
      %p86 = por %p84, %p85
      %p87 = scmp.ne.s32.totalorder %s79, %s81
      %p88 = scmp.eq.s32.totalorder %s24, 1
      %p89 = por %p87, %p88
      %p90 = scmp.ne.s32.totalorder %s81, %s82
      %p91 = scmp.eq.s32.totalorder %s24, 0
      %p92 = por %p90, %p91
      %p93 = scmp.ne.s32.totalorder %s81, %s82
      %p94 = scmp.eq.s32.totalorder %s25, 1
      %p95 = por %p93, %p94
      %p97 = scmp.ne.s32.totalorder %s82, %s96
      %p98 = scmp.eq.s32.totalorder %s25, 0
      %p99 = por %p97, %p98
      %s101 = sadd.s32 %s100, 1
      %p104 = scmp.eq.s32.totalorder %s19, 1
      %p105 = scmp.ne.s32.totalorder %s100, %s102
      %p106 = scmp.eq.s32.totalorder %s19, 0
      %p107 = por %p105, %p106
      %p108 = scmp.ne.s32.totalorder %s100, %s102
      %p109 = scmp.eq.s32.totalorder %s24, 1
      %p110 = por %p108, %p109
      %p111 = scmp.ne.s32.totalorder %s102, %s103
      %p112 = scmp.eq.s32.totalorder %s24, 0
      %p113 = por %p111, %p112
      %p114 = scmp.ne.s32.totalorder %s102, %s103
      %p115 = scmp.eq.s32.totalorder %s25, 1
      %p116 = por %p114, %p115
      %p118 = scmp.ne.s32.totalorder %s103, %s117
      %p119 = scmp.eq.s32.totalorder %s25, 0
      %p120 = por %p118, %p119
      %s121 = ssub.s32 %s19, %s26
      %p122 = scmp.eq.s32.totalorder %s121, 0
      %s124 = sadd.s32 %s123, 1
      %s125 = scalar_select %p122, %s123, %s124
      %p128 = pneg %p122
      %p129 = scmp.eq.s32.totalorder %s19, 1
      %p130 = por %p128, %p129
      %p131 = scmp.ne.s32.totalorder %s123, %s126
      %p132 = scmp.eq.s32.totalorder %s19, 0
      %p133 = por %p131, %p132
      %p134 = scmp.ne.s32.totalorder %s123, %s126
      %p135 = scmp.eq.s32.totalorder %s24, 1
      %p136 = por %p134, %p135
      %p137 = scmp.ne.s32.totalorder %s126, %s127
      %p138 = scmp.eq.s32.totalorder %s24, 0
      %p139 = por %p137, %p138
      %p140 = scmp.ne.s32.totalorder %s126, %s127
      %p141 = scmp.eq.s32.totalorder %s25, 1
      %p142 = por %p140, %p141
      %p144 = scmp.ne.s32.totalorder %s127, %s143
      %p145 = scmp.eq.s32.totalorder %s25, 0
      %p146 = por %p144, %p145
      %p147 = scmp.le.s32.totalorder 1, %s19
      %p148 = scmp.lt.s32.totalorder %s19, 3
      %p149 = pnand %p147, %p148
      %p150 = pneg %p149
      // Predicated region
      $region9: #{tpu_custom_call.1} parent=5 // pred_check
        _
      $region10: #{tpu_custom_call.1} parent=5 // pred_check_branch
        %152 = sbr.rel (%p149) target = $region12
      $region11: #{tpu_custom_call.1} parent=5 // pred_region
        %s153 = ssub.s32 %s19, 1
        // Predicated region
        $region13: #{tpu_custom_call.1} parent=11 // pred_check
          %p154 = pneg %p92
        $region14: #{tpu_custom_call.1} parent=11 // pred_check_branch
          %156 = sbr.rel (%p154) target = $region16
        $region15: #{tpu_custom_call.1} parent=11 // pred_region
          %s158 = ssub.s32 6144, 6144
          %159 = vsyncadd [#allocation6], %s158
          %s160 = sshll.u32 [#allocation7], 4
          %s161 = int_to_ptr.vmem [resolvable:$true] %s160
          %166 = dma.hbm_to_vmem [thread:$0]  %s2, 6144, %s161, [#allocation6], 384, 384, 24
        $region16: #{tpu_custom_call.1} parent=11 // pred_fallthru
          _
        // Predicated region
        $region17: #{tpu_custom_call.1} parent=11 // pred_check
          %p167 = pneg %p113
        $region18: #{tpu_custom_call.1} parent=11 // pred_check_branch
          %169 = sbr.rel (%p167) target = $region20
        $region19: #{tpu_custom_call.1} parent=11 // pred_region
          _
        $region20: #{tpu_custom_call.1} parent=11 // pred_fallthru
          _
      $region12: #{tpu_custom_call.1} parent=5 // pred_fallthru
        _
      %p170 = scmp.lt.s32.totalorder %s19, 2
      // Predicated region
      $region21: #{tpu_custom_call.1} parent=5 // pred_check
        %p171 = pneg %p170
      $region22: #{tpu_custom_call.1} parent=5 // pred_check_branch
        %173 = sbr.rel (%p171) target = $region24
      $region23: #{tpu_custom_call.1} parent=5 // pred_region
        // Predicated region
        $region25: #{tpu_custom_call.1} parent=23 // pred_check
          %p174 = pneg %p39
        $region26: #{tpu_custom_call.1} parent=23 // pred_check_branch
          %176 = sbr.rel (%p174) target = $region28
        $region27: #{tpu_custom_call.1} parent=23 // pred_region
          %s177 = sand.u32 %s29, 1
          %s178 = scalar_lea.sflag [#allocation3], %s177
          %s179 = sand.u32 %s29, 1
          %s180 = smul.addr %s179, 256
          %s181 = scalar_lea.vmem [#allocation2], %s180
          %s182 = smul.u32 32, %s19
          %s184 = ssub.s32 4096, 4096
          %185 = vsyncadd %s178, %s184
          %s186 = smul.addr %s182, 128
          %s187 = scalar_lea.hbm %s0, %s186
          %s188 = sshll.u32 %s181, 4
          %s189 = int_to_ptr.vmem [resolvable:$true] %s188
          %194 = dma.hbm_to_vmem [thread:$0]  %s187, 4096, %s189, %s178, 128, 128, 8
        $region28: #{tpu_custom_call.1} parent=23 // pred_fallthru
          _
        // Predicated region
        $region29: #{tpu_custom_call.1} parent=23 // pred_check
          %p195 = pneg %p65
        $region30: #{tpu_custom_call.1} parent=23 // pred_check_branch
          %197 = sbr.rel (%p195) target = $region32
        $region31: #{tpu_custom_call.1} parent=23 // pred_region
          %s198 = sand.u32 %s19, 1
          %s199 = scalar_lea.sflag [#allocation6], %s198
          %s200 = sand.u32 %s55, 1
          %s201 = smul.addr %s200, 256
          %s202 = scalar_lea.vmem [#allocation5], %s201
          %s203 = smul.u32 32, %s19
          %s205 = ssub.s32 4096, 4096
          %206 = vsyncadd %s199, %s205
          %s207 = smul.addr %s203, 128
          %s208 = scalar_lea.hbm %s1, %s207
          %s209 = sshll.u32 %s202, 4
          %s210 = int_to_ptr.vmem [resolvable:$true] %s209
          %215 = dma.hbm_to_vmem [thread:$0]  %s208, 4096, %s210, %s199, 128, 128, 8
        $region32: #{tpu_custom_call.1} parent=23 // pred_fallthru
          _
      $region24: #{tpu_custom_call.1} parent=5 // pred_fallthru
        _
      %p216 = scmp.le.s32.totalorder 1, %s19
      %p217 = scmp.lt.s32.totalorder %s19, 3
      %p218 = pnand %p216, %p217
      %p219 = pneg %p218
      // Predicated region
      $region33: #{tpu_custom_call.1} parent=5 // pred_check
        _
      $region34: #{tpu_custom_call.1} parent=5 // pred_check_branch
        %221 = sbr.rel (%p218) target = $region36
      $region35: #{tpu_custom_call.1} parent=5 // pred_region
        %s222 = ssub.s32 %s19, 1
        %s223 = sand.u32 %s32, 1
        %s224 = scalar_lea.sflag [#allocation3], %s223
        %s225 = sand.u32 %s32, 1
        %s226 = smul.addr %s225, 256
        %s227 = scalar_lea.vmem [#allocation2], %s226
        // Predicated region
        $region37: #{tpu_custom_call.1} parent=35 // pred_check
          %p228 = pneg %p45
        $region38: #{tpu_custom_call.1} parent=35 // pred_check_branch
          %230 = sbr.rel (%p228) target = $region40
        $region39: #{tpu_custom_call.1} parent=35 // pred_region
          %231 = dma.done %s224, 4096
        $region40: #{tpu_custom_call.1} parent=35 // pred_fallthru
          _
        %s232 = sand.u32 %s24, 1
        %s233 = scalar_lea.sflag [#allocation6], %s232
        %s234 = sand.u32 %s58, 1
        %s235 = smul.addr %s234, 256
        %s236 = scalar_lea.vmem [#allocation5], %s235
        // Predicated region
        $region41: #{tpu_custom_call.1} parent=35 // pred_check
          %p237 = pneg %p71
        $region42: #{tpu_custom_call.1} parent=35 // pred_check_branch
          %239 = sbr.rel (%p237) target = $region44
        $region43: #{tpu_custom_call.1} parent=35 // pred_region
          %240 = dma.done %s233, 4096
        $region44: #{tpu_custom_call.1} parent=35 // pred_fallthru
          _
        // Predicated region
        $region45: #{tpu_custom_call.1} parent=35 // pred_check
          %p241 = pneg %p92
        $region46: #{tpu_custom_call.1} parent=35 // pred_check_branch
          %243 = sbr.rel (%p241) target = $region48
        $region47: #{tpu_custom_call.1} parent=35 // pred_region
          %244 = dma.done [#allocation6], 6144
        $region48: #{tpu_custom_call.1} parent=35 // pred_fallthru
          _
        %s245 = sand.u32 %s32, 1
        %s246 = scalar_lea.sflag [#allocation3], %s245
        %s247 = sand.u32 %s32, 1
        %s248 = smul.addr %s247, 256
        %s249 = scalar_lea.vmem [#allocation2], %s248
        %p250 = pneg %p45
        %p251 = pneg %p42
        %s252 = sand.u32 %s24, 1
        %s253 = scalar_lea.sflag [#allocation6], %s252
        %s254 = sand.u32 %s58, 1
        %s255 = smul.addr %s254, 256
        %s256 = scalar_lea.vmem [#allocation5], %s255
        %p257 = pneg %p71
        %p258 = pneg %p68
        %p259 = pneg %p92
        %p260 = pneg %p89
        %p261 = pneg %p113
        %p262 = pneg %p110
        %p263 = pneg %p139
        %p264 = pneg %p136
        %s265 = sand.u32 %s126, 1
        %s266 = scalar_lea.sflag [#allocation4], %s265
        %s267 = sand.u32 %s126, 1
        %s268 = smul.addr %s267, 256
        %s269 = scalar_lea.vmem [#allocation8], %s268
        %s270 = smul.u32 32, %s24
        %s271 = smul.u32 32, %s24
        %s272 = smul.u32 32, %s24
        %v273 = vld [vmem:[%s227] sm:$0xff]
        %v274 = vld [vmem:[%s227 + $0x8] sm:$0xff]
        %v275 = vld [vmem:[%s227 + $0x10] sm:$0xff]
        %v276 = vld [vmem:[%s227 + $0x18] sm:$0xff]
        %v277 = vld [vmem:[%s227 + $0x20] sm:$0xff]
        %v278 = vld [vmem:[%s227 + $0x28] sm:$0xff]
        %v279 = vld [vmem:[%s227 + $0x30] sm:$0xff]
        %v280 = vld [vmem:[%s227 + $0x38] sm:$0xff]
        %v281 = vld [vmem:[%s227 + $0x40] sm:$0xff]
        %v282 = vld [vmem:[%s227 + $0x48] sm:$0xff]
        %v283 = vld [vmem:[%s227 + $0x50] sm:$0xff]
        %v284 = vld [vmem:[%s227 + $0x58] sm:$0xff]
        %v285 = vld [vmem:[%s227 + $0x60] sm:$0xff]
        %v286 = vld [vmem:[%s227 + $0x68] sm:$0xff]
        %v287 = vld [vmem:[%s227 + $0x70] sm:$0xff]
        %v288 = vld [vmem:[%s227 + $0x78] sm:$0xff]
        %v289 = vld [vmem:[%s227 + $0x80] sm:$0xff]
        %v290 = vld [vmem:[%s227 + $0x88] sm:$0xff]
        %v291 = vld [vmem:[%s227 + $0x90] sm:$0xff]
        %v292 = vld [vmem:[%s227 + $0x98] sm:$0xff]
        %v293 = vld [vmem:[%s227 + $0xa0] sm:$0xff]
        %v294 = vld [vmem:[%s227 + $0xa8] sm:$0xff]
        %v295 = vld [vmem:[%s227 + $0xb0] sm:$0xff]
        %v296 = vld [vmem:[%s227 + $0xb8] sm:$0xff]
        %v297 = vld [vmem:[%s227 + $0xc0] sm:$0xff]
        %v298 = vld [vmem:[%s227 + $0xc8] sm:$0xff]
        %v299 = vld [vmem:[%s227 + $0xd0] sm:$0xff]
        %v300 = vld [vmem:[%s227 + $0xd8] sm:$0xff]
        %v301 = vld [vmem:[%s227 + $0xe0] sm:$0xff]
        %v302 = vld [vmem:[%s227 + $0xe8] sm:$0xff]
        %v303 = vld [vmem:[%s227 + $0xf0] sm:$0xff]
        %v304 = vld [vmem:[%s227 + $0xf8] sm:$0xff]
        %v305 = vld [vmem:[%s236] sm:$0xff]
        %v306 = vld [vmem:[%s236 + $0x8] sm:$0xff]
        %v307 = vld [vmem:[%s236 + $0x10] sm:$0xff]
        %v308 = vld [vmem:[%s236 + $0x18] sm:$0xff]
        %v309 = vld [vmem:[%s236 + $0x20] sm:$0xff]
        %v310 = vld [vmem:[%s236 + $0x28] sm:$0xff]
        %v311 = vld [vmem:[%s236 + $0x30] sm:$0xff]
        %v312 = vld [vmem:[%s236 + $0x38] sm:$0xff]
        %v313 = vld [vmem:[%s236 + $0x40] sm:$0xff]
        %v314 = vld [vmem:[%s236 + $0x48] sm:$0xff]
        %v315 = vld [vmem:[%s236 + $0x50] sm:$0xff]
        %v316 = vld [vmem:[%s236 + $0x58] sm:$0xff]
        %v317 = vld [vmem:[%s236 + $0x60] sm:$0xff]
        %v318 = vld [vmem:[%s236 + $0x68] sm:$0xff]
        %v319 = vld [vmem:[%s236 + $0x70] sm:$0xff]
        %v320 = vld [vmem:[%s236 + $0x78] sm:$0xff]
        %v321 = vld [vmem:[%s236 + $0x80] sm:$0xff]
        %v322 = vld [vmem:[%s236 + $0x88] sm:$0xff]
        %v323 = vld [vmem:[%s236 + $0x90] sm:$0xff]
        %v324 = vld [vmem:[%s236 + $0x98] sm:$0xff]
        %v325 = vld [vmem:[%s236 + $0xa0] sm:$0xff]
        %v326 = vld [vmem:[%s236 + $0xa8] sm:$0xff]
        %v327 = vld [vmem:[%s236 + $0xb0] sm:$0xff]
        %v328 = vld [vmem:[%s236 + $0xb8] sm:$0xff]
        %v329 = vld [vmem:[%s236 + $0xc0] sm:$0xff]
        %v330 = vld [vmem:[%s236 + $0xc8] sm:$0xff]
        %v331 = vld [vmem:[%s236 + $0xd0] sm:$0xff]
        %v332 = vld [vmem:[%s236 + $0xd8] sm:$0xff]
        %v333 = vld [vmem:[%s236 + $0xe0] sm:$0xff]
        %v334 = vld [vmem:[%s236 + $0xe8] sm:$0xff]
        %v335 = vld [vmem:[%s236 + $0xf0] sm:$0xff]
        %v336 = vld [vmem:[%s236 + $0xf8] sm:$0xff]
        %v337 = vld [vmem:[#allocation7] sm:$0xff]
        %v338 = vld [vmem:[#allocation7 + $0x8] sm:$0xff]
        %v339 = vld [vmem:[#allocation7 + $0x10] sm:$0xff]
        %v340 = vld [vmem:[#allocation7 + $0x18] sm:$0xff]
        %v341 = vld [vmem:[#allocation7 + $0x20] sm:$0xff]
        %v342 = vld [vmem:[#allocation7 + $0x28] sm:$0xff]
        %v343 = vld [vmem:[#allocation7 + $0x30] sm:$0xff]
        %v344 = vld [vmem:[#allocation7 + $0x38] sm:$0xff]
        %v345 = vld [vmem:[#allocation7 + $0x40] sm:$0xff]
        %v346 = vld [vmem:[#allocation7 + $0x48] sm:$0xff]
        %v347 = vld [vmem:[#allocation7 + $0x50] sm:$0xff]
        %v348 = vld [vmem:[#allocation7 + $0x58] sm:$0xff]
        %v349 = vld [vmem:[#allocation7 + $0x60] sm:$0xff]
        %v350 = vld [vmem:[#allocation7 + $0x68] sm:$0xff]
        %v351 = vld [vmem:[#allocation7 + $0x70] sm:$0xff]
        %v352 = vld [vmem:[#allocation7 + $0x78] sm:$0xff]
        %v353 = vld [vmem:[#allocation7 + $0x80] sm:$0xff]
        %v354 = vld [vmem:[#allocation7 + $0x88] sm:$0xff]
        %v355 = vld [vmem:[#allocation7 + $0x90] sm:$0xff]
        %v356 = vld [vmem:[#allocation7 + $0x98] sm:$0xff]
        %v357 = vld [vmem:[#allocation7 + $0xa0] sm:$0xff]
        %v358 = vld [vmem:[#allocation7 + $0xa8] sm:$0xff]
        %v359 = vld [vmem:[#allocation7 + $0xb0] sm:$0xff]
        %v360 = vld [vmem:[#allocation7 + $0xb8] sm:$0xff]
        %v361 = vld [vmem:[#allocation7 + $0xc0] sm:$0xff]
        %v362 = vld [vmem:[#allocation7 + $0xc8] sm:$0xff]
        %v363 = vld [vmem:[#allocation7 + $0xd0] sm:$0xff]
        %v364 = vld [vmem:[#allocation7 + $0xd8] sm:$0xff]
        %v365 = vld [vmem:[#allocation7 + $0xe0] sm:$0xff]
        %v366 = vld [vmem:[#allocation7 + $0xe8] sm:$0xff]
        %v367 = vld [vmem:[#allocation7 + $0xf0] sm:$0xff]
        %v368 = vld [vmem:[#allocation7 + $0xf8] sm:$0xff]
        %v369 = vld [vmem:[#allocation7 + $0x100] sm:$0xff]
        %v370 = vld [vmem:[#allocation7 + $0x108] sm:$0xff]
        %v371 = vld [vmem:[#allocation7 + $0x110] sm:$0xff]
        %v372 = vld [vmem:[#allocation7 + $0x118] sm:$0xff]
        %v373 = vld [vmem:[#allocation7 + $0x120] sm:$0xff]
        %v374 = vld [vmem:[#allocation7 + $0x128] sm:$0xff]
        %v375 = vld [vmem:[#allocation7 + $0x130] sm:$0xff]
        %v376 = vld [vmem:[#allocation7 + $0x138] sm:$0xff]
        %v377 = vld [vmem:[#allocation7 + $0x140] sm:$0xff]
        %v378 = vld [vmem:[#allocation7 + $0x148] sm:$0xff]
        %v379 = vld [vmem:[#allocation7 + $0x150] sm:$0xff]
        %v380 = vld [vmem:[#allocation7 + $0x158] sm:$0xff]
        %v381 = vld [vmem:[#allocation7 + $0x160] sm:$0xff]
        %v382 = vld [vmem:[#allocation7 + $0x168] sm:$0xff]
        %v383 = vld [vmem:[#allocation7 + $0x170] sm:$0xff]
        %v384 = vld [vmem:[#allocation7 + $0x178] sm:$0xff]
        %v385 = vld [vmem:[%s3] sm:$0x7]
        %v387 = vlaneseq
        %v388 = vshrl.u32 %v387, 7
        %v389 = vsub.s32 0, %v388
        %v390 = vrot.slane %v385, %v389
        %v391 = vlaneseq
        %v392 = vshrl.u32 %v391, 7
        %v393 = vsub.s32 1, %v392
        %v394 = vrot.slane %v385, %v393
        %v395 = vlaneseq
        %v396 = vshrl.u32 %v395, 7
        %v397 = vsub.s32 2, %v396
        %v398 = vrot.slane %v385, %v397
        %402 = vmatprep.subr.mxu0 %v338
        %403 = vmatpush1.msra.mxu0 %v337
        %404 = vmatprep.subr.mxu0 %v341
        %405 = vmatpush1.msra.mxu0 %v340
        %406 = vmatprep.subr.mxu0 %v344
        %407 = vmatpush1.msra.mxu0 %v343
        %408 = vmatprep.subr.mxu0 %v347
        %409 = vmatpush1.msra.mxu0 %v346
        %410 = vmatprep.subr.mxu0 %v350
        %411 = vmatpush1.msra.mxu0 %v349
        %412 = vmatprep.subr.mxu0 %v353
        %413 = vmatpush1.msra.mxu0 %v352
        %414 = vmatprep.subr.mxu0 %v356
        %415 = vmatpush1.msra.mxu0 %v355
        %416 = vmatprep.subr.mxu0 %v359
        %417 = vmatpush1.msra.mxu0 %v358
        %418 = vmatprep.subr.mxu0 %v362
        %419 = vmatpush1.msra.mxu0 %v361
        %420 = vmatprep.subr.mxu0 %v365
        %421 = vmatpush1.msra.mxu0 %v364
        %422 = vmatprep.subr.mxu0 %v368
        %423 = vmatpush1.msra.mxu0 %v367
        %424 = vmatprep.subr.mxu0 %v371
        %425 = vmatpush1.msra.mxu0 %v370
        %426 = vmatprep.subr.mxu0 %v374
        %427 = vmatpush1.msra.mxu0 %v373
        %428 = vmatprep.subr.mxu0 %v377
        %429 = vmatpush1.msra.mxu0 %v376
        %430 = vmatprep.subr.mxu0 %v380
        %431 = vmatpush1.msra.mxu0 %v379
        %432 = vmatprep.subr.mxu0 %v383
        %433 = vmatpush1.msra.mxu0 %v382
        %434 = vmatprep.subr.mxu0 0.0
        %435 = vmatpush1.msra.mxu0 0.0
        %436 = vmatprep.subr.mxu0 0.0
        %437 = vmatpush1.msra.mxu0 0.0
        %438 = vmatprep.subr.mxu0 0.0
        %439 = vmatpush1.msra.mxu0 0.0
        %440 = vmatprep.subr.mxu0 0.0
        %441 = vmatpush1.msra.mxu0 0.0
        %442 = vmatprep.subr.mxu0 0.0
        %443 = vmatpush1.msra.mxu0 0.0
        %444 = vmatprep.subr.mxu0 0.0
        %445 = vmatpush1.msra.mxu0 0.0
        %446 = vmatprep.subr.mxu0 0.0
        %447 = vmatpush1.msra.mxu0 0.0
        %448 = vmatprep.subr.mxu0 0.0
        %449 = vmatpush1.msra.mxu0 0.0
        %450 = vmatprep.subr.mxu0 0.0
        %451 = vmatpush1.msra.mxu0 0.0
        %452 = vmatprep.subr.mxu0 0.0
        %453 = vmatpush1.msra.mxu0 0.0
        %454 = vmatprep.subr.mxu0 0.0
        %455 = vmatpush1.msra.mxu0 0.0
        %456 = vmatprep.subr.mxu0 0.0
        %457 = vmatpush1.msra.mxu0 0.0
        %458 = vmatprep.subr.mxu0 0.0
        %459 = vmatpush1.msra.mxu0 0.0
        %460 = vmatprep.subr.mxu0 0.0
        %461 = vmatpush1.msra.mxu0 0.0
        %462 = vmatprep.subr.mxu0 0.0
        %463 = vmatpush1.msra.mxu0 0.0
        %464 = vmatprep.subr.mxu0 0.0
        %465 = vmatpush1.msra.mxu0 0.0
        %466 = vmatprep.mubr.f32.mxu0 0.0
        %467 = vmatmul.mubr.f32.gmra.mrb[0].mxu0 %v273
        %v468 = vpop.f32.mrb[0].mxu0
        %v469 = vadd.f32 %v390, %v468
        %v470 = vpop.f32.mrb[0].mxu0
        %v471 = vadd.f32 %v394, %v470
        %472 = vmatprep.mubr.f32.mxu0 0.0
        %473 = vmatmul.mubr.f32.gmra.mrb[0].mxu0 %v274
        %v474 = vpop.f32.mrb[0].mxu0
        %v475 = vadd.f32 %v390, %v474
        %v476 = vpop.f32.mrb[0].mxu0
        %v477 = vadd.f32 %v394, %v476
        %478 = vmatprep.mubr.f32.mxu0 0.0
        %479 = vmatmul.mubr.f32.gmra.mrb[0].mxu0 %v275
        %v480 = vpop.f32.mrb[0].mxu0
        %v481 = vadd.f32 %v390, %v480
        %v482 = vpop.f32.mrb[0].mxu0
        %v483 = vadd.f32 %v394, %v482
        %484 = vmatprep.mubr.f32.mxu0 0.0
        %485 = vmatmul.mubr.f32.gmra.mrb[0].mxu0 %v276
        %v486 = vpop.f32.mrb[0].mxu0
        %v487 = vadd.f32 %v390, %v486
        %v488 = vpop.f32.mrb[0].mxu0
        %v489 = vadd.f32 %v394, %v488
        %490 = vmatprep.mubr.f32.mxu0 0.0
        %491 = vmatmul.mubr.f32.gmra.mrb[0].mxu0 %v277
        %v492 = vpop.f32.mrb[0].mxu0
        %v493 = vadd.f32 %v390, %v492
        %v494 = vpop.f32.mrb[0].mxu0
        %v495 = vadd.f32 %v394, %v494
        %496 = vmatprep.mubr.f32.mxu0 0.0
        %497 = vmatmul.mubr.f32.gmra.mrb[0].mxu0 %v278
        %v498 = vpop.f32.mrb[0].mxu0
        %v499 = vadd.f32 %v390, %v498
        %v500 = vpop.f32.mrb[0].mxu0
        %v501 = vadd.f32 %v394, %v500
        %502 = vmatprep.mubr.f32.mxu0 0.0
        %503 = vmatmul.mubr.f32.gmra.mrb[0].mxu0 %v279
        %v504 = vpop.f32.mrb[0].mxu0
        %v505 = vadd.f32 %v390, %v504
        %v506 = vpop.f32.mrb[0].mxu0
        %v507 = vadd.f32 %v394, %v506
        %508 = vmatprep.mubr.f32.mxu0 0.0
        %509 = vmatmul.mubr.f32.gmra.mrb[0].mxu0 %v280
        %v510 = vpop.f32.mrb[0].mxu0
        %v511 = vadd.f32 %v390, %v510
        %v512 = vpop.f32.mrb[0].mxu0
        %v513 = vadd.f32 %v394, %v512
        %514 = vmatprep.mubr.f32.mxu0 0.0
        %515 = vmatmul.mubr.f32.gmra.mrb[0].mxu0 %v281
        %v516 = vpop.f32.mrb[0].mxu0
        %v517 = vadd.f32 %v390, %v516
        %v518 = vpop.f32.mrb[0].mxu0
        %v519 = vadd.f32 %v394, %v518
        %520 = vmatprep.mubr.f32.mxu0 0.0
        %521 = vmatmul.mubr.f32.gmra.mrb[0].mxu0 %v282
        %v522 = vpop.f32.mrb[0].mxu0
        %v523 = vadd.f32 %v390, %v522
        %v524 = vpop.f32.mrb[0].mxu0
        %v525 = vadd.f32 %v394, %v524
        %526 = vmatprep.mubr.f32.mxu0 0.0
        %527 = vmatmul.mubr.f32.gmra.mrb[0].mxu0 %v283
        %v528 = vpop.f32.mrb[0].mxu0
        %v529 = vadd.f32 %v390, %v528
        %v530 = vpop.f32.mrb[0].mxu0
        %v531 = vadd.f32 %v394, %v530
        %532 = vmatprep.mubr.f32.mxu0 0.0
        %533 = vmatmul.mubr.f32.gmra.mrb[0].mxu0 %v284
        %v534 = vpop.f32.mrb[0].mxu0
        %v535 = vadd.f32 %v390, %v534
        %v536 = vpop.f32.mrb[0].mxu0
        %v537 = vadd.f32 %v394, %v536
        %538 = vmatprep.mubr.f32.mxu0 0.0
        %539 = vmatmul.mubr.f32.gmra.mrb[0].mxu0 %v285
        %v540 = vpop.f32.mrb[0].mxu0
        %v541 = vadd.f32 %v390, %v540
        %v542 = vpop.f32.mrb[0].mxu0
        %v543 = vadd.f32 %v394, %v542
        %544 = vmatprep.mubr.f32.mxu0 0.0
        %545 = vmatmul.mubr.f32.gmra.mrb[0].mxu0 %v286
        %v546 = vpop.f32.mrb[0].mxu0
        %v547 = vadd.f32 %v390, %v546
        %v548 = vpop.f32.mrb[0].mxu0
        %v549 = vadd.f32 %v394, %v548
        %550 = vmatprep.mubr.f32.mxu0 0.0
        %551 = vmatmul.mubr.f32.gmra.mrb[0].mxu0 %v287
        %v552 = vpop.f32.mrb[0].mxu0
        %v553 = vadd.f32 %v390, %v552
        %v554 = vpop.f32.mrb[0].mxu0
        %v555 = vadd.f32 %v394, %v554
        %556 = vmatprep.mubr.f32.mxu0 0.0
        %557 = vmatmul.mubr.f32.gmra.mrb[0].mxu0 %v288
        %v558 = vpop.f32.mrb[0].mxu0
        %v559 = vadd.f32 %v390, %v558
        %v560 = vpop.f32.mrb[0].mxu0
        %v561 = vadd.f32 %v394, %v560
        %562 = vmatprep.mubr.f32.mxu0 0.0
        %563 = vmatmul.mubr.f32.gmra.mrb[0].mxu0 %v289
        %v564 = vpop.f32.mrb[0].mxu0
        %v565 = vadd.f32 %v390, %v564
        %v566 = vpop.f32.mrb[0].mxu0
        %v567 = vadd.f32 %v394, %v566
        %568 = vmatprep.mubr.f32.mxu0 0.0
        %569 = vmatmul.mubr.f32.gmra.mrb[0].mxu0 %v290
        %v570 = vpop.f32.mrb[0].mxu0
        %v571 = vadd.f32 %v390, %v570
        %v572 = vpop.f32.mrb[0].mxu0
        %v573 = vadd.f32 %v394, %v572
        %574 = vmatprep.mubr.f32.mxu0 0.0
        %575 = vmatmul.mubr.f32.gmra.mrb[0].mxu0 %v291
        %v576 = vpop.f32.mrb[0].mxu0
        %v577 = vadd.f32 %v390, %v576
        %v578 = vpop.f32.mrb[0].mxu0
        %v579 = vadd.f32 %v394, %v578
        %580 = vmatprep.mubr.f32.mxu0 0.0
        %581 = vmatmul.mubr.f32.gmra.mrb[0].mxu0 %v292
        %v582 = vpop.f32.mrb[0].mxu0
        %v583 = vadd.f32 %v390, %v582
        %v584 = vpop.f32.mrb[0].mxu0
        %v585 = vadd.f32 %v394, %v584
        %586 = vmatprep.mubr.f32.mxu0 0.0
        %587 = vmatmul.mubr.f32.gmra.mrb[0].mxu0 %v293
        %v588 = vpop.f32.mrb[0].mxu0
        %v589 = vadd.f32 %v390, %v588
        %v590 = vpop.f32.mrb[0].mxu0
        %v591 = vadd.f32 %v394, %v590
        %592 = vmatprep.mubr.f32.mxu0 0.0
        %593 = vmatmul.mubr.f32.gmra.mrb[0].mxu0 %v294
        %v594 = vpop.f32.mrb[0].mxu0
        %v595 = vadd.f32 %v390, %v594
        %v596 = vpop.f32.mrb[0].mxu0
        %v597 = vadd.f32 %v394, %v596
        %598 = vmatprep.mubr.f32.mxu0 0.0
        %599 = vmatmul.mubr.f32.gmra.mrb[0].mxu0 %v295
        %v600 = vpop.f32.mrb[0].mxu0
        %v601 = vadd.f32 %v390, %v600
        %v602 = vpop.f32.mrb[0].mxu0
        %v603 = vadd.f32 %v394, %v602
        %604 = vmatprep.mubr.f32.mxu0 0.0
        %605 = vmatmul.mubr.f32.gmra.mrb[0].mxu0 %v296
        %v606 = vpop.f32.mrb[0].mxu0
        %v607 = vadd.f32 %v390, %v606
        %v608 = vpop.f32.mrb[0].mxu0
        %v609 = vadd.f32 %v394, %v608
        %610 = vmatprep.mubr.f32.mxu0 0.0
        %611 = vmatmul.mubr.f32.gmra.mrb[0].mxu0 %v297
        %v612 = vpop.f32.mrb[0].mxu0
        %v613 = vadd.f32 %v390, %v612
        %v614 = vpop.f32.mrb[0].mxu0
        %v615 = vadd.f32 %v394, %v614
        %616 = vmatprep.mubr.f32.mxu0 0.0
        %617 = vmatmul.mubr.f32.gmra.mrb[0].mxu0 %v298
        %v618 = vpop.f32.mrb[0].mxu0
        %v619 = vadd.f32 %v390, %v618
        %v620 = vpop.f32.mrb[0].mxu0
        %v621 = vadd.f32 %v394, %v620
        %622 = vmatprep.mubr.f32.mxu0 0.0
        %623 = vmatmul.mubr.f32.gmra.mrb[0].mxu0 %v299
        %v624 = vpop.f32.mrb[0].mxu0
        %v625 = vadd.f32 %v390, %v624
        %v626 = vpop.f32.mrb[0].mxu0
        %v627 = vadd.f32 %v394, %v626
        %628 = vmatprep.mubr.f32.mxu0 0.0
        %629 = vmatmul.mubr.f32.gmra.mrb[0].mxu0 %v300
        %v630 = vpop.f32.mrb[0].mxu0
        %v631 = vadd.f32 %v390, %v630
        %v632 = vpop.f32.mrb[0].mxu0
        %v633 = vadd.f32 %v394, %v632
        %634 = vmatprep.mubr.f32.mxu0 0.0
        %635 = vmatmul.mubr.f32.gmra.mrb[0].mxu0 %v301
        %v636 = vpop.f32.mrb[0].mxu0
        %v637 = vadd.f32 %v390, %v636
        %v638 = vpop.f32.mrb[0].mxu0
        %v639 = vadd.f32 %v394, %v638
        %640 = vmatprep.mubr.f32.mxu0 0.0
        %641 = vmatmul.mubr.f32.gmra.mrb[0].mxu0 %v302
        %v642 = vpop.f32.mrb[0].mxu0
        %v643 = vadd.f32 %v390, %v642
        %v644 = vpop.f32.mrb[0].mxu0
        %v645 = vadd.f32 %v394, %v644
        %646 = vmatprep.mubr.f32.mxu0 0.0
        %647 = vmatmul.mubr.f32.gmra.mrb[0].mxu0 %v303
        %v648 = vpop.f32.mrb[0].mxu0
        %v649 = vadd.f32 %v390, %v648
        %v650 = vpop.f32.mrb[0].mxu0
        %v651 = vadd.f32 %v394, %v650
        %652 = vmatprep.mubr.f32.mxu0 0.0
        %653 = vmatmul.mubr.f32.gmra.mrb[0].mxu0 %v304
        %v654 = vpop.f32.mrb[0].mxu0
        %v655 = vadd.f32 %v390, %v654
        %v656 = vpop.f32.mrb[0].mxu0
        %v657 = vadd.f32 %v394, %v656
        %658 = vdwg.mxu0
        %659 = vmatprep.subr.mxu0 0.0
        %660 = vmatpush1.msra.mxu0 %v339
        %661 = vmatprep.subr.mxu0 0.0
        %662 = vmatpush1.msra.mxu0 %v342
        %663 = vmatprep.subr.mxu0 0.0
        %664 = vmatpush1.msra.mxu0 %v345
        %665 = vmatprep.subr.mxu0 0.0
        %666 = vmatpush1.msra.mxu0 %v348
        %667 = vmatprep.subr.mxu0 0.0
        %668 = vmatpush1.msra.mxu0 %v351
        %669 = vmatprep.subr.mxu0 0.0
        %670 = vmatpush1.msra.mxu0 %v354
        %671 = vmatprep.subr.mxu0 0.0
        %672 = vmatpush1.msra.mxu0 %v357
        %673 = vmatprep.subr.mxu0 0.0
        %674 = vmatpush1.msra.mxu0 %v360
        %675 = vmatprep.subr.mxu0 0.0
        %676 = vmatpush1.msra.mxu0 %v363
        %677 = vmatprep.subr.mxu0 0.0
        %678 = vmatpush1.msra.mxu0 %v366
        %679 = vmatprep.subr.mxu0 0.0
        %680 = vmatpush1.msra.mxu0 %v369
        %681 = vmatprep.subr.mxu0 0.0
        %682 = vmatpush1.msra.mxu0 %v372
        %683 = vmatprep.subr.mxu0 0.0
        %684 = vmatpush1.msra.mxu0 %v375
        %685 = vmatprep.subr.mxu0 0.0
        %686 = vmatpush1.msra.mxu0 %v378
        %687 = vmatprep.subr.mxu0 0.0
        %688 = vmatpush1.msra.mxu0 %v381
        %689 = vmatprep.subr.mxu0 0.0
        %690 = vmatpush1.msra.mxu0 %v384
        %691 = vmatprep.subr.mxu0 0.0
        %692 = vmatpush1.msra.mxu0 0.0
        %693 = vmatprep.subr.mxu0 0.0
        %694 = vmatpush1.msra.mxu0 0.0
        %695 = vmatprep.subr.mxu0 0.0
        %696 = vmatpush1.msra.mxu0 0.0
        %697 = vmatprep.subr.mxu0 0.0
        %698 = vmatpush1.msra.mxu0 0.0
        %699 = vmatprep.subr.mxu0 0.0
        %700 = vmatpush1.msra.mxu0 0.0
        %701 = vmatprep.subr.mxu0 0.0
        %702 = vmatpush1.msra.mxu0 0.0
        %703 = vmatprep.subr.mxu0 0.0
        %704 = vmatpush1.msra.mxu0 0.0
        %705 = vmatprep.subr.mxu0 0.0
        %706 = vmatpush1.msra.mxu0 0.0
        %707 = vmatprep.subr.mxu0 0.0
        %708 = vmatpush1.msra.mxu0 0.0
        %709 = vmatprep.subr.mxu0 0.0
        %710 = vmatpush1.msra.mxu0 0.0
        %711 = vmatprep.subr.mxu0 0.0
        %712 = vmatpush1.msra.mxu0 0.0
        %713 = vmatprep.subr.mxu0 0.0
        %714 = vmatpush1.msra.mxu0 0.0
        %715 = vmatprep.subr.mxu0 0.0
        %716 = vmatpush1.msra.mxu0 0.0
        %717 = vmatprep.subr.mxu0 0.0
        %718 = vmatpush1.msra.mxu0 0.0
        %719 = vmatprep.subr.mxu0 0.0
        %720 = vmatpush1.msra.mxu0 0.0
        %721 = vmatprep.subr.mxu0 0.0
        %722 = vmatpush1.msra.mxu0 0.0
        %723 = vmatprep.mubr.f32.mxu0 0.0
        %724 = vmatmul.mubr.f32.gmra.mrb[0].mxu0 %v273
        %v725 = vpop.f32.mrb[0].mxu0
        %v726 = vadd.f32 %v398, %v725
        %v727 = vpop.f32.mrb[0].mxu0
        %728 = vmatprep.mubr.f32.mxu0 0.0
        %729 = vmatmul.mubr.f32.gmra.mrb[0].mxu0 %v274
        %v730 = vpop.f32.mrb[0].mxu0
        %v731 = vadd.f32 %v398, %v730
        %v732 = vpop.f32.mrb[0].mxu0
        %733 = vmatprep.mubr.f32.mxu0 0.0
        %734 = vmatmul.mubr.f32.gmra.mrb[0].mxu0 %v275
        %v735 = vpop.f32.mrb[0].mxu0
        %v736 = vadd.f32 %v398, %v735
        %v737 = vpop.f32.mrb[0].mxu0
        %738 = vmatprep.mubr.f32.mxu0 0.0
        %739 = vmatmul.mubr.f32.gmra.mrb[0].mxu0 %v276
        %v740 = vpop.f32.mrb[0].mxu0
        %v741 = vadd.f32 %v398, %v740
        %v742 = vpop.f32.mrb[0].mxu0
        %743 = vmatprep.mubr.f32.mxu0 0.0
        %744 = vmatmul.mubr.f32.gmra.mrb[0].mxu0 %v277
        %v745 = vpop.f32.mrb[0].mxu0
        %v746 = vadd.f32 %v398, %v745
        %v747 = vpop.f32.mrb[0].mxu0
        %748 = vmatprep.mubr.f32.mxu0 0.0
        %749 = vmatmul.mubr.f32.gmra.mrb[0].mxu0 %v278
        %v750 = vpop.f32.mrb[0].mxu0
        %v751 = vadd.f32 %v398, %v750
        %v752 = vpop.f32.mrb[0].mxu0
        %753 = vmatprep.mubr.f32.mxu0 0.0
        %754 = vmatmul.mubr.f32.gmra.mrb[0].mxu0 %v279
        %v755 = vpop.f32.mrb[0].mxu0
        %v756 = vadd.f32 %v398, %v755
        %v757 = vpop.f32.mrb[0].mxu0
        %758 = vmatprep.mubr.f32.mxu0 0.0
        %759 = vmatmul.mubr.f32.gmra.mrb[0].mxu0 %v280
        %v760 = vpop.f32.mrb[0].mxu0
        %v761 = vadd.f32 %v398, %v760
        %v762 = vpop.f32.mrb[0].mxu0
        %763 = vmatprep.mubr.f32.mxu0 0.0
        %764 = vmatmul.mubr.f32.gmra.mrb[0].mxu0 %v281
        %v765 = vpop.f32.mrb[0].mxu0
        %v766 = vadd.f32 %v398, %v765
        %v767 = vpop.f32.mrb[0].mxu0
        %768 = vmatprep.mubr.f32.mxu0 0.0
        %769 = vmatmul.mubr.f32.gmra.mrb[0].mxu0 %v282
        %v770 = vpop.f32.mrb[0].mxu0
        %v771 = vadd.f32 %v398, %v770
        %v772 = vpop.f32.mrb[0].mxu0
        %773 = vmatprep.mubr.f32.mxu0 0.0
        %774 = vmatmul.mubr.f32.gmra.mrb[0].mxu0 %v283
        %v775 = vpop.f32.mrb[0].mxu0
        %v776 = vadd.f32 %v398, %v775
        %v777 = vpop.f32.mrb[0].mxu0
        %778 = vmatprep.mubr.f32.mxu0 0.0
        %779 = vmatmul.mubr.f32.gmra.mrb[0].mxu0 %v284
        %v780 = vpop.f32.mrb[0].mxu0
        %v781 = vadd.f32 %v398, %v780
        %v782 = vpop.f32.mrb[0].mxu0
        %783 = vmatprep.mubr.f32.mxu0 0.0
        %784 = vmatmul.mubr.f32.gmra.mrb[0].mxu0 %v285
        %v785 = vpop.f32.mrb[0].mxu0
        %v786 = vadd.f32 %v398, %v785
        %v787 = vpop.f32.mrb[0].mxu0
        %788 = vmatprep.mubr.f32.mxu0 0.0
        %789 = vmatmul.mubr.f32.gmra.mrb[0].mxu0 %v286
        %v790 = vpop.f32.mrb[0].mxu0
        %v791 = vadd.f32 %v398, %v790
        %v792 = vpop.f32.mrb[0].mxu0
        %793 = vmatprep.mubr.f32.mxu0 0.0
        %794 = vmatmul.mubr.f32.gmra.mrb[0].mxu0 %v287
        %v795 = vpop.f32.mrb[0].mxu0
        %v796 = vadd.f32 %v398, %v795
        %v797 = vpop.f32.mrb[0].mxu0
        %798 = vmatprep.mubr.f32.mxu0 0.0
        %799 = vmatmul.mubr.f32.gmra.mrb[0].mxu0 %v288
        %v800 = vpop.f32.mrb[0].mxu0
        %v801 = vadd.f32 %v398, %v800
        %v802 = vpop.f32.mrb[0].mxu0
        %803 = vmatprep.mubr.f32.mxu0 0.0
        %804 = vmatmul.mubr.f32.gmra.mrb[0].mxu0 %v289
        %v805 = vpop.f32.mrb[0].mxu0
        %v806 = vadd.f32 %v398, %v805
        %v807 = vpop.f32.mrb[0].mxu0
        %808 = vmatprep.mubr.f32.mxu0 0.0
        %809 = vmatmul.mubr.f32.gmra.mrb[0].mxu0 %v290
        %v810 = vpop.f32.mrb[0].mxu0
        %v811 = vadd.f32 %v398, %v810
        %v812 = vpop.f32.mrb[0].mxu0
        %813 = vmatprep.mubr.f32.mxu0 0.0
        %814 = vmatmul.mubr.f32.gmra.mrb[0].mxu0 %v291
        %v815 = vpop.f32.mrb[0].mxu0
        %v816 = vadd.f32 %v398, %v815
        %v817 = vpop.f32.mrb[0].mxu0
        %818 = vmatprep.mubr.f32.mxu0 0.0
        %819 = vmatmul.mubr.f32.gmra.mrb[0].mxu0 %v292
        %v820 = vpop.f32.mrb[0].mxu0
        %v821 = vadd.f32 %v398, %v820
        %v822 = vpop.f32.mrb[0].mxu0
        %823 = vmatprep.mubr.f32.mxu0 0.0
        %824 = vmatmul.mubr.f32.gmra.mrb[0].mxu0 %v293
        %v825 = vpop.f32.mrb[0].mxu0
        %v826 = vadd.f32 %v398, %v825
        %v827 = vpop.f32.mrb[0].mxu0
        %828 = vmatprep.mubr.f32.mxu0 0.0
        %829 = vmatmul.mubr.f32.gmra.mrb[0].mxu0 %v294
        %v830 = vpop.f32.mrb[0].mxu0
        %v831 = vadd.f32 %v398, %v830
        %v832 = vpop.f32.mrb[0].mxu0
        %833 = vmatprep.mubr.f32.mxu0 0.0
        %834 = vmatmul.mubr.f32.gmra.mrb[0].mxu0 %v295
        %v835 = vpop.f32.mrb[0].mxu0
        %v836 = vadd.f32 %v398, %v835
        %v837 = vpop.f32.mrb[0].mxu0
        %838 = vmatprep.mubr.f32.mxu0 0.0
        %839 = vmatmul.mubr.f32.gmra.mrb[0].mxu0 %v296
        %v840 = vpop.f32.mrb[0].mxu0
        %v841 = vadd.f32 %v398, %v840
        %v842 = vpop.f32.mrb[0].mxu0
        %843 = vmatprep.mubr.f32.mxu0 0.0
        %844 = vmatmul.mubr.f32.gmra.mrb[0].mxu0 %v297
        %v845 = vpop.f32.mrb[0].mxu0
        %v846 = vadd.f32 %v398, %v845
        %v847 = vpop.f32.mrb[0].mxu0
        %848 = vmatprep.mubr.f32.mxu0 0.0
        %849 = vmatmul.mubr.f32.gmra.mrb[0].mxu0 %v298
        %v850 = vpop.f32.mrb[0].mxu0
        %v851 = vadd.f32 %v398, %v850
        %v852 = vpop.f32.mrb[0].mxu0
        %853 = vmatprep.mubr.f32.mxu0 0.0
        %854 = vmatmul.mubr.f32.gmra.mrb[0].mxu0 %v299
        %v855 = vpop.f32.mrb[0].mxu0
        %v856 = vadd.f32 %v398, %v855
        %v857 = vpop.f32.mrb[0].mxu0
        %858 = vmatprep.mubr.f32.mxu0 0.0
        %859 = vmatmul.mubr.f32.gmra.mrb[0].mxu0 %v300
        %v860 = vpop.f32.mrb[0].mxu0
        %v861 = vadd.f32 %v398, %v860
        %v862 = vpop.f32.mrb[0].mxu0
        %863 = vmatprep.mubr.f32.mxu0 0.0
        %864 = vmatmul.mubr.f32.gmra.mrb[0].mxu0 %v301
        %v865 = vpop.f32.mrb[0].mxu0
        %v866 = vadd.f32 %v398, %v865
        %v867 = vpop.f32.mrb[0].mxu0
        %868 = vmatprep.mubr.f32.mxu0 0.0
        %869 = vmatmul.mubr.f32.gmra.mrb[0].mxu0 %v302
        %v870 = vpop.f32.mrb[0].mxu0
        %v871 = vadd.f32 %v398, %v870
        %v872 = vpop.f32.mrb[0].mxu0
        %873 = vmatprep.mubr.f32.mxu0 0.0
        %874 = vmatmul.mubr.f32.gmra.mrb[0].mxu0 %v303
        %v875 = vpop.f32.mrb[0].mxu0
        %v876 = vadd.f32 %v398, %v875
        %v877 = vpop.f32.mrb[0].mxu0
        %878 = vmatprep.mubr.f32.mxu0 0.0
        %879 = vmatmul.mubr.f32.gmra.mrb[0].mxu0 %v304
        %v880 = vpop.f32.mrb[0].mxu0
        %v881 = vadd.f32 %v398, %v880
        %v882 = vpop.f32.mrb[0].mxu0
        %883 = vdwg.mxu0
        %884 = vmatprep.subr.mxu0 %v338
        %885 = vmatpush1.msra.mxu0 %v337
        %886 = vmatprep.subr.mxu0 %v341
        %887 = vmatpush1.msra.mxu0 %v340
        %888 = vmatprep.subr.mxu0 %v344
        %889 = vmatpush1.msra.mxu0 %v343
        %890 = vmatprep.subr.mxu0 %v347
        %891 = vmatpush1.msra.mxu0 %v346
        %892 = vmatprep.subr.mxu0 %v350
        %893 = vmatpush1.msra.mxu0 %v349
        %894 = vmatprep.subr.mxu0 %v353
        %895 = vmatpush1.msra.mxu0 %v352
        %896 = vmatprep.subr.mxu0 %v356
        %897 = vmatpush1.msra.mxu0 %v355
        %898 = vmatprep.subr.mxu0 %v359
        %899 = vmatpush1.msra.mxu0 %v358
        %900 = vmatprep.subr.mxu0 %v362
        %901 = vmatpush1.msra.mxu0 %v361
        %902 = vmatprep.subr.mxu0 %v365
        %903 = vmatpush1.msra.mxu0 %v364
        %904 = vmatprep.subr.mxu0 %v368
        %905 = vmatpush1.msra.mxu0 %v367
        %906 = vmatprep.subr.mxu0 %v371
        %907 = vmatpush1.msra.mxu0 %v370
        %908 = vmatprep.subr.mxu0 %v374
        %909 = vmatpush1.msra.mxu0 %v373
        %910 = vmatprep.subr.mxu0 %v377
        %911 = vmatpush1.msra.mxu0 %v376
        %912 = vmatprep.subr.mxu0 %v380
        %913 = vmatpush1.msra.mxu0 %v379
        %914 = vmatprep.subr.mxu0 %v383
        %915 = vmatpush1.msra.mxu0 %v382
        %916 = vmatprep.subr.mxu0 0.0
        %917 = vmatpush1.msra.mxu0 0.0
        %918 = vmatprep.subr.mxu0 0.0
        %919 = vmatpush1.msra.mxu0 0.0
        %920 = vmatprep.subr.mxu0 0.0
        %921 = vmatpush1.msra.mxu0 0.0
        %922 = vmatprep.subr.mxu0 0.0
        %923 = vmatpush1.msra.mxu0 0.0
        %924 = vmatprep.subr.mxu0 0.0
        %925 = vmatpush1.msra.mxu0 0.0
        %926 = vmatprep.subr.mxu0 0.0
        %927 = vmatpush1.msra.mxu0 0.0
        %928 = vmatprep.subr.mxu0 0.0
        %929 = vmatpush1.msra.mxu0 0.0
        %930 = vmatprep.subr.mxu0 0.0
        %931 = vmatpush1.msra.mxu0 0.0
        %932 = vmatprep.subr.mxu0 0.0
        %933 = vmatpush1.msra.mxu0 0.0
        %934 = vmatprep.subr.mxu0 0.0
        %935 = vmatpush1.msra.mxu0 0.0
        %936 = vmatprep.subr.mxu0 0.0
        %937 = vmatpush1.msra.mxu0 0.0
        %938 = vmatprep.subr.mxu0 0.0
        %939 = vmatpush1.msra.mxu0 0.0
        %940 = vmatprep.subr.mxu0 0.0
        %941 = vmatpush1.msra.mxu0 0.0
        %942 = vmatprep.subr.mxu0 0.0
        %943 = vmatpush1.msra.mxu0 0.0
        %944 = vmatprep.subr.mxu0 0.0
        %945 = vmatpush1.msra.mxu0 0.0
        %946 = vmatprep.subr.mxu0 0.0
        %947 = vmatpush1.msra.mxu0 0.0
        %948 = vmatprep.mubr.f32.mxu0 0.0
        %949 = vmatmul.mubr.f32.gmra.mrb[0].mxu0 %v305
        %v950 = vpop.f32.mrb[0].mxu0
        %v951 = vadd.f32 %v390, %v950
        %v952 = vpop.f32.mrb[0].mxu0
        %v953 = vadd.f32 %v394, %v952
        %954 = vmatprep.mubr.f32.mxu0 0.0
        %955 = vmatmul.mubr.f32.gmra.mrb[0].mxu0 %v306
        %v956 = vpop.f32.mrb[0].mxu0
        %v957 = vadd.f32 %v390, %v956
        %v958 = vpop.f32.mrb[0].mxu0
        %v959 = vadd.f32 %v394, %v958
        %960 = vmatprep.mubr.f32.mxu0 0.0
        %961 = vmatmul.mubr.f32.gmra.mrb[0].mxu0 %v307
        %v962 = vpop.f32.mrb[0].mxu0
        %v963 = vadd.f32 %v390, %v962
        %v964 = vpop.f32.mrb[0].mxu0
        %v965 = vadd.f32 %v394, %v964
        %966 = vmatprep.mubr.f32.mxu0 0.0
        %967 = vmatmul.mubr.f32.gmra.mrb[0].mxu0 %v308
        %v968 = vpop.f32.mrb[0].mxu0
        %v969 = vadd.f32 %v390, %v968
        %v970 = vpop.f32.mrb[0].mxu0
        %v971 = vadd.f32 %v394, %v970
        %972 = vmatprep.mubr.f32.mxu0 0.0
        %973 = vmatmul.mubr.f32.gmra.mrb[0].mxu0 %v309
        %v974 = vpop.f32.mrb[0].mxu0
        %v975 = vadd.f32 %v390, %v974
        %v976 = vpop.f32.mrb[0].mxu0
        %v977 = vadd.f32 %v394, %v976
        %978 = vmatprep.mubr.f32.mxu0 0.0
        %979 = vmatmul.mubr.f32.gmra.mrb[0].mxu0 %v310
        %v980 = vpop.f32.mrb[0].mxu0
        %v981 = vadd.f32 %v390, %v980
        %v982 = vpop.f32.mrb[0].mxu0
        %v983 = vadd.f32 %v394, %v982
        %984 = vmatprep.mubr.f32.mxu0 0.0
        %985 = vmatmul.mubr.f32.gmra.mrb[0].mxu0 %v311
        %v986 = vpop.f32.mrb[0].mxu0
        %v987 = vadd.f32 %v390, %v986
        %v988 = vpop.f32.mrb[0].mxu0
        %v989 = vadd.f32 %v394, %v988
        %990 = vmatprep.mubr.f32.mxu0 0.0
        %991 = vmatmul.mubr.f32.gmra.mrb[0].mxu0 %v312
        %v992 = vpop.f32.mrb[0].mxu0
        %v993 = vadd.f32 %v390, %v992
        %v994 = vpop.f32.mrb[0].mxu0
        %v995 = vadd.f32 %v394, %v994
        %996 = vmatprep.mubr.f32.mxu0 0.0
        %997 = vmatmul.mubr.f32.gmra.mrb[0].mxu0 %v313
        %v998 = vpop.f32.mrb[0].mxu0
        %v999 = vadd.f32 %v390, %v998
        %v1000 = vpop.f32.mrb[0].mxu0
        %v1001 = vadd.f32 %v394, %v1000
        %1002 = vmatprep.mubr.f32.mxu0 0.0
        %1003 = vmatmul.mubr.f32.gmra.mrb[0].mxu0 %v314
        %v1004 = vpop.f32.mrb[0].mxu0
        %v1005 = vadd.f32 %v390, %v1004
        %v1006 = vpop.f32.mrb[0].mxu0
        %v1007 = vadd.f32 %v394, %v1006
        %1008 = vmatprep.mubr.f32.mxu0 0.0
        %1009 = vmatmul.mubr.f32.gmra.mrb[0].mxu0 %v315
        %v1010 = vpop.f32.mrb[0].mxu0
        %v1011 = vadd.f32 %v390, %v1010
        %v1012 = vpop.f32.mrb[0].mxu0
        %v1013 = vadd.f32 %v394, %v1012
        %1014 = vmatprep.mubr.f32.mxu0 0.0
        %1015 = vmatmul.mubr.f32.gmra.mrb[0].mxu0 %v316
        %v1016 = vpop.f32.mrb[0].mxu0
        %v1017 = vadd.f32 %v390, %v1016
        %v1018 = vpop.f32.mrb[0].mxu0
        %v1019 = vadd.f32 %v394, %v1018
        %1020 = vmatprep.mubr.f32.mxu0 0.0
        %1021 = vmatmul.mubr.f32.gmra.mrb[0].mxu0 %v317
        %v1022 = vpop.f32.mrb[0].mxu0
        %v1023 = vadd.f32 %v390, %v1022
        %v1024 = vpop.f32.mrb[0].mxu0
        %v1025 = vadd.f32 %v394, %v1024
        %1026 = vmatprep.mubr.f32.mxu0 0.0
        %1027 = vmatmul.mubr.f32.gmra.mrb[0].mxu0 %v318
        %v1028 = vpop.f32.mrb[0].mxu0
        %v1029 = vadd.f32 %v390, %v1028
        %v1030 = vpop.f32.mrb[0].mxu0
        %v1031 = vadd.f32 %v394, %v1030
        %1032 = vmatprep.mubr.f32.mxu0 0.0
        %1033 = vmatmul.mubr.f32.gmra.mrb[0].mxu0 %v319
        %v1034 = vpop.f32.mrb[0].mxu0
        %v1035 = vadd.f32 %v390, %v1034
        %v1036 = vpop.f32.mrb[0].mxu0
        %v1037 = vadd.f32 %v394, %v1036
        %1038 = vmatprep.mubr.f32.mxu0 0.0
        %1039 = vmatmul.mubr.f32.gmra.mrb[0].mxu0 %v320
        %v1040 = vpop.f32.mrb[0].mxu0
        %v1041 = vadd.f32 %v390, %v1040
        %v1042 = vpop.f32.mrb[0].mxu0
        %v1043 = vadd.f32 %v394, %v1042
        %1044 = vmatprep.mubr.f32.mxu0 0.0
        %1045 = vmatmul.mubr.f32.gmra.mrb[0].mxu0 %v321
        %v1046 = vpop.f32.mrb[0].mxu0
        %v1047 = vadd.f32 %v390, %v1046
        %v1048 = vpop.f32.mrb[0].mxu0
        %v1049 = vadd.f32 %v394, %v1048
        %1050 = vmatprep.mubr.f32.mxu0 0.0
        %1051 = vmatmul.mubr.f32.gmra.mrb[0].mxu0 %v322
        %v1052 = vpop.f32.mrb[0].mxu0
        %v1053 = vadd.f32 %v390, %v1052
        %v1054 = vpop.f32.mrb[0].mxu0
        %v1055 = vadd.f32 %v394, %v1054
        %1056 = vmatprep.mubr.f32.mxu0 0.0
        %1057 = vmatmul.mubr.f32.gmra.mrb[0].mxu0 %v323
        %v1058 = vpop.f32.mrb[0].mxu0
        %v1059 = vadd.f32 %v390, %v1058
        %v1060 = vpop.f32.mrb[0].mxu0
        %v1061 = vadd.f32 %v394, %v1060
        %1062 = vmatprep.mubr.f32.mxu0 0.0
        %1063 = vmatmul.mubr.f32.gmra.mrb[0].mxu0 %v324
        %v1064 = vpop.f32.mrb[0].mxu0
        %v1065 = vadd.f32 %v390, %v1064
        %v1066 = vpop.f32.mrb[0].mxu0
        %v1067 = vadd.f32 %v394, %v1066
        %1068 = vmatprep.mubr.f32.mxu0 0.0
        %1069 = vmatmul.mubr.f32.gmra.mrb[0].mxu0 %v325
        %v1070 = vpop.f32.mrb[0].mxu0
        %v1071 = vadd.f32 %v390, %v1070
        %v1072 = vpop.f32.mrb[0].mxu0
        %v1073 = vadd.f32 %v394, %v1072
        %1074 = vmatprep.mubr.f32.mxu0 0.0
        %1075 = vmatmul.mubr.f32.gmra.mrb[0].mxu0 %v326
        %v1076 = vpop.f32.mrb[0].mxu0
        %v1077 = vadd.f32 %v390, %v1076
        %v1078 = vpop.f32.mrb[0].mxu0
        %v1079 = vadd.f32 %v394, %v1078
        %1080 = vmatprep.mubr.f32.mxu0 0.0
        %1081 = vmatmul.mubr.f32.gmra.mrb[0].mxu0 %v327
        %v1082 = vpop.f32.mrb[0].mxu0
        %v1083 = vadd.f32 %v390, %v1082
        %v1084 = vpop.f32.mrb[0].mxu0
        %v1085 = vadd.f32 %v394, %v1084
        %1086 = vmatprep.mubr.f32.mxu0 0.0
        %1087 = vmatmul.mubr.f32.gmra.mrb[0].mxu0 %v328
        %v1088 = vpop.f32.mrb[0].mxu0
        %v1089 = vadd.f32 %v390, %v1088
        %v1090 = vpop.f32.mrb[0].mxu0
        %v1091 = vadd.f32 %v394, %v1090
        %1092 = vmatprep.mubr.f32.mxu0 0.0
        %1093 = vmatmul.mubr.f32.gmra.mrb[0].mxu0 %v329
        %v1094 = vpop.f32.mrb[0].mxu0
        %v1095 = vadd.f32 %v390, %v1094
        %v1096 = vpop.f32.mrb[0].mxu0
        %v1097 = vadd.f32 %v394, %v1096
        %1098 = vmatprep.mubr.f32.mxu0 0.0
        %1099 = vmatmul.mubr.f32.gmra.mrb[0].mxu0 %v330
        %v1100 = vpop.f32.mrb[0].mxu0
        %v1101 = vadd.f32 %v390, %v1100
        %v1102 = vpop.f32.mrb[0].mxu0
        %v1103 = vadd.f32 %v394, %v1102
        %1104 = vmatprep.mubr.f32.mxu0 0.0
        %1105 = vmatmul.mubr.f32.gmra.mrb[0].mxu0 %v331
        %v1106 = vpop.f32.mrb[0].mxu0
        %v1107 = vadd.f32 %v390, %v1106
        %v1108 = vpop.f32.mrb[0].mxu0
        %v1109 = vadd.f32 %v394, %v1108
        %1110 = vmatprep.mubr.f32.mxu0 0.0
        %1111 = vmatmul.mubr.f32.gmra.mrb[0].mxu0 %v332
        %v1112 = vpop.f32.mrb[0].mxu0
        %v1113 = vadd.f32 %v390, %v1112
        %v1114 = vpop.f32.mrb[0].mxu0
        %v1115 = vadd.f32 %v394, %v1114
        %1116 = vmatprep.mubr.f32.mxu0 0.0
        %1117 = vmatmul.mubr.f32.gmra.mrb[0].mxu0 %v333
        %v1118 = vpop.f32.mrb[0].mxu0
        %v1119 = vadd.f32 %v390, %v1118
        %v1120 = vpop.f32.mrb[0].mxu0
        %v1121 = vadd.f32 %v394, %v1120
        %1122 = vmatprep.mubr.f32.mxu0 0.0
        %1123 = vmatmul.mubr.f32.gmra.mrb[0].mxu0 %v334
        %v1124 = vpop.f32.mrb[0].mxu0
        %v1125 = vadd.f32 %v390, %v1124
        %v1126 = vpop.f32.mrb[0].mxu0
        %v1127 = vadd.f32 %v394, %v1126
        %1128 = vmatprep.mubr.f32.mxu0 0.0
        %1129 = vmatmul.mubr.f32.gmra.mrb[0].mxu0 %v335
        %v1130 = vpop.f32.mrb[0].mxu0
        %v1131 = vadd.f32 %v390, %v1130
        %v1132 = vpop.f32.mrb[0].mxu0
        %v1133 = vadd.f32 %v394, %v1132
        %1134 = vmatprep.mubr.f32.mxu0 0.0
        %1135 = vmatmul.mubr.f32.gmra.mrb[0].mxu0 %v336
        %v1136 = vpop.f32.mrb[0].mxu0
        %v1137 = vadd.f32 %v390, %v1136
        %v1138 = vpop.f32.mrb[0].mxu0
        %v1139 = vadd.f32 %v394, %v1138
        %1140 = vdwg.mxu0
        %1141 = vmatprep.subr.mxu0 0.0
        %1142 = vmatpush1.msra.mxu0 %v339
        %1143 = vmatprep.subr.mxu0 0.0
        %1144 = vmatpush1.msra.mxu0 %v342
        %1145 = vmatprep.subr.mxu0 0.0
        %1146 = vmatpush1.msra.mxu0 %v345
        %1147 = vmatprep.subr.mxu0 0.0
        %1148 = vmatpush1.msra.mxu0 %v348
        %1149 = vmatprep.subr.mxu0 0.0
        %1150 = vmatpush1.msra.mxu0 %v351
        %1151 = vmatprep.subr.mxu0 0.0
        %1152 = vmatpush1.msra.mxu0 %v354
        %1153 = vmatprep.subr.mxu0 0.0
        %1154 = vmatpush1.msra.mxu0 %v357
        %1155 = vmatprep.subr.mxu0 0.0
        %1156 = vmatpush1.msra.mxu0 %v360
        %1157 = vmatprep.subr.mxu0 0.0
        %1158 = vmatpush1.msra.mxu0 %v363
        %1159 = vmatprep.subr.mxu0 0.0
        %1160 = vmatpush1.msra.mxu0 %v366
        %1161 = vmatprep.subr.mxu0 0.0
        %1162 = vmatpush1.msra.mxu0 %v369
        %1163 = vmatprep.subr.mxu0 0.0
        %1164 = vmatpush1.msra.mxu0 %v372
        %1165 = vmatprep.subr.mxu0 0.0
        %1166 = vmatpush1.msra.mxu0 %v375
        %1167 = vmatprep.subr.mxu0 0.0
        %1168 = vmatpush1.msra.mxu0 %v378
        %1169 = vmatprep.subr.mxu0 0.0
        %1170 = vmatpush1.msra.mxu0 %v381
        %1171 = vmatprep.subr.mxu0 0.0
        %1172 = vmatpush1.msra.mxu0 %v384
        %1173 = vmatprep.subr.mxu0 0.0
        %1174 = vmatpush1.msra.mxu0 0.0
        %1175 = vmatprep.subr.mxu0 0.0
        %1176 = vmatpush1.msra.mxu0 0.0
        %1177 = vmatprep.subr.mxu0 0.0
        %1178 = vmatpush1.msra.mxu0 0.0
        %1179 = vmatprep.subr.mxu0 0.0
        %1180 = vmatpush1.msra.mxu0 0.0
        %1181 = vmatprep.subr.mxu0 0.0
        %1182 = vmatpush1.msra.mxu0 0.0
        %1183 = vmatprep.subr.mxu0 0.0
        %1184 = vmatpush1.msra.mxu0 0.0
        %1185 = vmatprep.subr.mxu0 0.0
        %1186 = vmatpush1.msra.mxu0 0.0
        %1187 = vmatprep.subr.mxu0 0.0
        %1188 = vmatpush1.msra.mxu0 0.0
        %1189 = vmatprep.subr.mxu0 0.0
        %1190 = vmatpush1.msra.mxu0 0.0
        %1191 = vmatprep.subr.mxu0 0.0
        %1192 = vmatpush1.msra.mxu0 0.0
        %1193 = vmatprep.subr.mxu0 0.0
        %1194 = vmatpush1.msra.mxu0 0.0
        %1195 = vmatprep.subr.mxu0 0.0
        %1196 = vmatpush1.msra.mxu0 0.0
        %1197 = vmatprep.subr.mxu0 0.0
        %1198 = vmatpush1.msra.mxu0 0.0
        %1199 = vmatprep.subr.mxu0 0.0
        %1200 = vmatpush1.msra.mxu0 0.0
        %1201 = vmatprep.subr.mxu0 0.0
        %1202 = vmatpush1.msra.mxu0 0.0
        %1203 = vmatprep.subr.mxu0 0.0
        %1204 = vmatpush1.msra.mxu0 0.0
        %1205 = vmatprep.mubr.f32.mxu0 0.0
        %1206 = vmatmul.mubr.f32.gmra.mrb[0].mxu0 %v305
        %v1207 = vpop.f32.mrb[0].mxu0
        %v1208 = vadd.f32 %v398, %v1207
        %v1209 = vpop.f32.mrb[0].mxu0
        %1210 = vmatprep.mubr.f32.mxu0 0.0
        %1211 = vmatmul.mubr.f32.gmra.mrb[0].mxu0 %v306
        %v1212 = vpop.f32.mrb[0].mxu0
        %v1213 = vadd.f32 %v398, %v1212
        %v1214 = vpop.f32.mrb[0].mxu0
        %1215 = vmatprep.mubr.f32.mxu0 0.0
        %1216 = vmatmul.mubr.f32.gmra.mrb[0].mxu0 %v307
        %v1217 = vpop.f32.mrb[0].mxu0
        %v1218 = vadd.f32 %v398, %v1217
        %v1219 = vpop.f32.mrb[0].mxu0
        %1220 = vmatprep.mubr.f32.mxu0 0.0
        %1221 = vmatmul.mubr.f32.gmra.mrb[0].mxu0 %v308
        %v1222 = vpop.f32.mrb[0].mxu0
        %v1223 = vadd.f32 %v398, %v1222
        %v1224 = vpop.f32.mrb[0].mxu0
        %1225 = vmatprep.mubr.f32.mxu0 0.0
        %1226 = vmatmul.mubr.f32.gmra.mrb[0].mxu0 %v309
        %v1227 = vpop.f32.mrb[0].mxu0
        %v1228 = vadd.f32 %v398, %v1227
        %v1229 = vpop.f32.mrb[0].mxu0
        %1230 = vmatprep.mubr.f32.mxu0 0.0
        %1231 = vmatmul.mubr.f32.gmra.mrb[0].mxu0 %v310
        %v1232 = vpop.f32.mrb[0].mxu0
        %v1233 = vadd.f32 %v398, %v1232
        %v1234 = vpop.f32.mrb[0].mxu0
        %1235 = vmatprep.mubr.f32.mxu0 0.0
        %1236 = vmatmul.mubr.f32.gmra.mrb[0].mxu0 %v311
        %v1237 = vpop.f32.mrb[0].mxu0
        %v1238 = vadd.f32 %v398, %v1237
        %v1239 = vpop.f32.mrb[0].mxu0
        %1240 = vmatprep.mubr.f32.mxu0 0.0
        %1241 = vmatmul.mubr.f32.gmra.mrb[0].mxu0 %v312
        %v1242 = vpop.f32.mrb[0].mxu0
        %v1243 = vadd.f32 %v398, %v1242
        %v1244 = vpop.f32.mrb[0].mxu0
        %1245 = vmatprep.mubr.f32.mxu0 0.0
        %1246 = vmatmul.mubr.f32.gmra.mrb[0].mxu0 %v313
        %v1247 = vpop.f32.mrb[0].mxu0
        %v1248 = vadd.f32 %v398, %v1247
        %v1249 = vpop.f32.mrb[0].mxu0
        %1250 = vmatprep.mubr.f32.mxu0 0.0
        %1251 = vmatmul.mubr.f32.gmra.mrb[0].mxu0 %v314
        %v1252 = vpop.f32.mrb[0].mxu0
        %v1253 = vadd.f32 %v398, %v1252
        %v1254 = vpop.f32.mrb[0].mxu0
        %1255 = vmatprep.mubr.f32.mxu0 0.0
        %1256 = vmatmul.mubr.f32.gmra.mrb[0].mxu0 %v315
        %v1257 = vpop.f32.mrb[0].mxu0
        %v1258 = vadd.f32 %v398, %v1257
        %v1259 = vpop.f32.mrb[0].mxu0
        %1260 = vmatprep.mubr.f32.mxu0 0.0
        %1261 = vmatmul.mubr.f32.gmra.mrb[0].mxu0 %v316
        %v1262 = vpop.f32.mrb[0].mxu0
        %v1263 = vadd.f32 %v398, %v1262
        %v1264 = vpop.f32.mrb[0].mxu0
        %1265 = vmatprep.mubr.f32.mxu0 0.0
        %1266 = vmatmul.mubr.f32.gmra.mrb[0].mxu0 %v317
        %v1267 = vpop.f32.mrb[0].mxu0
        %v1268 = vadd.f32 %v398, %v1267
        %v1269 = vpop.f32.mrb[0].mxu0
        %1270 = vmatprep.mubr.f32.mxu0 0.0
        %1271 = vmatmul.mubr.f32.gmra.mrb[0].mxu0 %v318
        %v1272 = vpop.f32.mrb[0].mxu0
        %v1273 = vadd.f32 %v398, %v1272
        %v1274 = vpop.f32.mrb[0].mxu0
        %1275 = vmatprep.mubr.f32.mxu0 0.0
        %1276 = vmatmul.mubr.f32.gmra.mrb[0].mxu0 %v319
        %v1277 = vpop.f32.mrb[0].mxu0
        %v1278 = vadd.f32 %v398, %v1277
        %v1279 = vpop.f32.mrb[0].mxu0
        %1280 = vmatprep.mubr.f32.mxu0 0.0
        %1281 = vmatmul.mubr.f32.gmra.mrb[0].mxu0 %v320
        %v1282 = vpop.f32.mrb[0].mxu0
        %v1283 = vadd.f32 %v398, %v1282
        %v1284 = vpop.f32.mrb[0].mxu0
        %1285 = vmatprep.mubr.f32.mxu0 0.0
        %1286 = vmatmul.mubr.f32.gmra.mrb[0].mxu0 %v321
        %v1287 = vpop.f32.mrb[0].mxu0
        %v1288 = vadd.f32 %v398, %v1287
        %v1289 = vpop.f32.mrb[0].mxu0
        %1290 = vmatprep.mubr.f32.mxu0 0.0
        %1291 = vmatmul.mubr.f32.gmra.mrb[0].mxu0 %v322
        %v1292 = vpop.f32.mrb[0].mxu0
        %v1293 = vadd.f32 %v398, %v1292
        %v1294 = vpop.f32.mrb[0].mxu0
        %1295 = vmatprep.mubr.f32.mxu0 0.0
        %1296 = vmatmul.mubr.f32.gmra.mrb[0].mxu0 %v323
        %v1297 = vpop.f32.mrb[0].mxu0
        %v1298 = vadd.f32 %v398, %v1297
        %v1299 = vpop.f32.mrb[0].mxu0
        %1300 = vmatprep.mubr.f32.mxu0 0.0
        %1301 = vmatmul.mubr.f32.gmra.mrb[0].mxu0 %v324
        %v1302 = vpop.f32.mrb[0].mxu0
        %v1303 = vadd.f32 %v398, %v1302
        %v1304 = vpop.f32.mrb[0].mxu0
        %1305 = vmatprep.mubr.f32.mxu0 0.0
        %1306 = vmatmul.mubr.f32.gmra.mrb[0].mxu0 %v325
        %v1307 = vpop.f32.mrb[0].mxu0
        %v1308 = vadd.f32 %v398, %v1307
        %v1309 = vpop.f32.mrb[0].mxu0
        %1310 = vmatprep.mubr.f32.mxu0 0.0
        %1311 = vmatmul.mubr.f32.gmra.mrb[0].mxu0 %v326
        %v1312 = vpop.f32.mrb[0].mxu0
        %v1313 = vadd.f32 %v398, %v1312
        %v1314 = vpop.f32.mrb[0].mxu0
        %1315 = vmatprep.mubr.f32.mxu0 0.0
        %1316 = vmatmul.mubr.f32.gmra.mrb[0].mxu0 %v327
        %v1317 = vpop.f32.mrb[0].mxu0
        %v1318 = vadd.f32 %v398, %v1317
        %v1319 = vpop.f32.mrb[0].mxu0
        %1320 = vmatprep.mubr.f32.mxu0 0.0
        %1321 = vmatmul.mubr.f32.gmra.mrb[0].mxu0 %v328
        %v1322 = vpop.f32.mrb[0].mxu0
        %v1323 = vadd.f32 %v398, %v1322
        %v1324 = vpop.f32.mrb[0].mxu0
        %1325 = vmatprep.mubr.f32.mxu0 0.0
        %1326 = vmatmul.mubr.f32.gmra.mrb[0].mxu0 %v329
        %v1327 = vpop.f32.mrb[0].mxu0
        %v1328 = vadd.f32 %v398, %v1327
        %v1329 = vpop.f32.mrb[0].mxu0
        %1330 = vmatprep.mubr.f32.mxu0 0.0
        %1331 = vmatmul.mubr.f32.gmra.mrb[0].mxu0 %v330
        %v1332 = vpop.f32.mrb[0].mxu0
        %v1333 = vadd.f32 %v398, %v1332
        %v1334 = vpop.f32.mrb[0].mxu0
        %1335 = vmatprep.mubr.f32.mxu0 0.0
        %1336 = vmatmul.mubr.f32.gmra.mrb[0].mxu0 %v331
        %v1337 = vpop.f32.mrb[0].mxu0
        %v1338 = vadd.f32 %v398, %v1337
        %v1339 = vpop.f32.mrb[0].mxu0
        %1340 = vmatprep.mubr.f32.mxu0 0.0
        %1341 = vmatmul.mubr.f32.gmra.mrb[0].mxu0 %v332
        %v1342 = vpop.f32.mrb[0].mxu0
        %v1343 = vadd.f32 %v398, %v1342
        %v1344 = vpop.f32.mrb[0].mxu0
        %1345 = vmatprep.mubr.f32.mxu0 0.0
        %1346 = vmatmul.mubr.f32.gmra.mrb[0].mxu0 %v333
        %v1347 = vpop.f32.mrb[0].mxu0
        %v1348 = vadd.f32 %v398, %v1347
        %v1349 = vpop.f32.mrb[0].mxu0
        %1350 = vmatprep.mubr.f32.mxu0 0.0
        %1351 = vmatmul.mubr.f32.gmra.mrb[0].mxu0 %v334
        %v1352 = vpop.f32.mrb[0].mxu0
        %v1353 = vadd.f32 %v398, %v1352
        %v1354 = vpop.f32.mrb[0].mxu0
        %1355 = vmatprep.mubr.f32.mxu0 0.0
        %1356 = vmatmul.mubr.f32.gmra.mrb[0].mxu0 %v335
        %v1357 = vpop.f32.mrb[0].mxu0
        %v1358 = vadd.f32 %v398, %v1357
        %v1359 = vpop.f32.mrb[0].mxu0
        %1360 = vmatprep.mubr.f32.mxu0 0.0
        %1361 = vmatmul.mubr.f32.gmra.mrb[0].mxu0 %v336
        %v1362 = vpop.f32.mrb[0].mxu0
        %v1363 = vadd.f32 %v398, %v1362
        %v1364 = vpop.f32.mrb[0].mxu0
        %1365 = vdwg.mxu0
        %v1366 = vmul.f32 %v469, %v471
        %v1367 = vmul.f32 %v475, %v477
        %v1368 = vmul.f32 %v481, %v483
        %v1369 = vmul.f32 %v487, %v489
        %v1370 = vmul.f32 %v493, %v495
        %v1371 = vmul.f32 %v499, %v501
        %v1372 = vmul.f32 %v505, %v507
        %v1373 = vmul.f32 %v511, %v513
        %v1374 = vmul.f32 %v517, %v519
        %v1375 = vmul.f32 %v523, %v525
        %v1376 = vmul.f32 %v529, %v531
        %v1377 = vmul.f32 %v535, %v537
        %v1378 = vmul.f32 %v541, %v543
        %v1379 = vmul.f32 %v547, %v549
        %v1380 = vmul.f32 %v553, %v555
        %v1381 = vmul.f32 %v559, %v561
        %v1382 = vmul.f32 %v565, %v567
        %v1383 = vmul.f32 %v571, %v573
        %v1384 = vmul.f32 %v577, %v579
        %v1385 = vmul.f32 %v583, %v585
        %v1386 = vmul.f32 %v589, %v591
        %v1387 = vmul.f32 %v595, %v597
        %v1388 = vmul.f32 %v601, %v603
        %v1389 = vmul.f32 %v607, %v609
        %v1390 = vmul.f32 %v613, %v615
        %v1391 = vmul.f32 %v619, %v621
        %v1392 = vmul.f32 %v625, %v627
        %v1393 = vmul.f32 %v631, %v633
        %v1394 = vmul.f32 %v637, %v639
        %v1395 = vmul.f32 %v643, %v645
        %v1396 = vmul.f32 %v649, %v651
        %v1397 = vmul.f32 %v655, %v657
        %1398 = vadd.xlane.f32.xlu0 %v1366
        %v1399 = vpop.xlane.xlu0 %1398
        %1400 = vadd.xlane.f32.xlu0 %v1367
        %v1401 = vpop.xlane.xlu0 %1400
        %1402 = vadd.xlane.f32.xlu0 %v1368
        %v1403 = vpop.xlane.xlu0 %1402
        %1404 = vadd.xlane.f32.xlu0 %v1369
        %v1405 = vpop.xlane.xlu0 %1404
        %1406 = vadd.xlane.f32.xlu0 %v1370
        %v1407 = vpop.xlane.xlu0 %1406
        %1408 = vadd.xlane.f32.xlu0 %v1371
        %v1409 = vpop.xlane.xlu0 %1408
        %1410 = vadd.xlane.f32.xlu0 %v1372
        %v1411 = vpop.xlane.xlu0 %1410
        %1412 = vadd.xlane.f32.xlu0 %v1373
        %v1413 = vpop.xlane.xlu0 %1412
        %1414 = vadd.xlane.f32.xlu0 %v1374
        %v1415 = vpop.xlane.xlu0 %1414
        %1416 = vadd.xlane.f32.xlu0 %v1375
        %v1417 = vpop.xlane.xlu0 %1416
        %1418 = vadd.xlane.f32.xlu0 %v1376
        %v1419 = vpop.xlane.xlu0 %1418
        %1420 = vadd.xlane.f32.xlu0 %v1377
        %v1421 = vpop.xlane.xlu0 %1420
        %1422 = vadd.xlane.f32.xlu0 %v1378
        %v1423 = vpop.xlane.xlu0 %1422
        %1424 = vadd.xlane.f32.xlu0 %v1379
        %v1425 = vpop.xlane.xlu0 %1424
        %1426 = vadd.xlane.f32.xlu0 %v1380
        %v1427 = vpop.xlane.xlu0 %1426
        %1428 = vadd.xlane.f32.xlu0 %v1381
        %v1429 = vpop.xlane.xlu0 %1428
        %1430 = vadd.xlane.f32.xlu0 %v1382
        %v1431 = vpop.xlane.xlu0 %1430
        %1432 = vadd.xlane.f32.xlu0 %v1383
        %v1433 = vpop.xlane.xlu0 %1432
        %1434 = vadd.xlane.f32.xlu0 %v1384
        %v1435 = vpop.xlane.xlu0 %1434
        %1436 = vadd.xlane.f32.xlu0 %v1385
        %v1437 = vpop.xlane.xlu0 %1436
        %1438 = vadd.xlane.f32.xlu0 %v1386
        %v1439 = vpop.xlane.xlu0 %1438
        %1440 = vadd.xlane.f32.xlu0 %v1387
        %v1441 = vpop.xlane.xlu0 %1440
        %1442 = vadd.xlane.f32.xlu0 %v1388
        %v1443 = vpop.xlane.xlu0 %1442
        %1444 = vadd.xlane.f32.xlu0 %v1389
        %v1445 = vpop.xlane.xlu0 %1444
        %1446 = vadd.xlane.f32.xlu0 %v1390
        %v1447 = vpop.xlane.xlu0 %1446
        %1448 = vadd.xlane.f32.xlu0 %v1391
        %v1449 = vpop.xlane.xlu0 %1448
        %1450 = vadd.xlane.f32.xlu0 %v1392
        %v1451 = vpop.xlane.xlu0 %1450
        %1452 = vadd.xlane.f32.xlu0 %v1393
        %v1453 = vpop.xlane.xlu0 %1452
        %1454 = vadd.xlane.f32.xlu0 %v1394
        %v1455 = vpop.xlane.xlu0 %1454
        %1456 = vadd.xlane.f32.xlu0 %v1395
        %v1457 = vpop.xlane.xlu0 %1456
        %1458 = vadd.xlane.f32.xlu0 %v1396
        %v1459 = vpop.xlane.xlu0 %1458
        %1460 = vadd.xlane.f32.xlu0 %v1397
        %v1461 = vpop.xlane.xlu0 %1460
        %v1462 = vmul.f32 %v1399, 0.088388346
        %v1463 = vmul.f32 %v1401, 0.088388346
        %v1464 = vmul.f32 %v1403, 0.088388346
        %v1465 = vmul.f32 %v1405, 0.088388346
        %v1466 = vmul.f32 %v1407, 0.088388346
        %v1467 = vmul.f32 %v1409, 0.088388346
        %v1468 = vmul.f32 %v1411, 0.088388346
        %v1469 = vmul.f32 %v1413, 0.088388346
        %v1470 = vmul.f32 %v1415, 0.088388346
        %v1471 = vmul.f32 %v1417, 0.088388346
        %v1472 = vmul.f32 %v1419, 0.088388346
        %v1473 = vmul.f32 %v1421, 0.088388346
        %v1474 = vmul.f32 %v1423, 0.088388346
        %v1475 = vmul.f32 %v1425, 0.088388346
        %v1476 = vmul.f32 %v1427, 0.088388346
        %v1477 = vmul.f32 %v1429, 0.088388346
        %v1478 = vmul.f32 %v1431, 0.088388346
        %v1479 = vmul.f32 %v1433, 0.088388346
        %v1480 = vmul.f32 %v1435, 0.088388346
        %v1481 = vmul.f32 %v1437, 0.088388346
        %v1482 = vmul.f32 %v1439, 0.088388346
        %v1483 = vmul.f32 %v1441, 0.088388346
        %v1484 = vmul.f32 %v1443, 0.088388346
        %v1485 = vmul.f32 %v1445, 0.088388346
        %v1486 = vmul.f32 %v1447, 0.088388346
        %v1487 = vmul.f32 %v1449, 0.088388346
        %v1488 = vmul.f32 %v1451, 0.088388346
        %v1489 = vmul.f32 %v1453, 0.088388346
        %v1490 = vmul.f32 %v1455, 0.088388346
        %v1491 = vmul.f32 %v1457, 0.088388346
        %v1492 = vmul.f32 %v1459, 0.088388346
        %v1493 = vmul.f32 %v1461, 0.088388346
        %v1494 = vmul.f32 %v469, %v953
        %v1495 = vmul.f32 %v475, %v959
        %v1496 = vmul.f32 %v481, %v965
        %v1497 = vmul.f32 %v487, %v971
        %v1498 = vmul.f32 %v493, %v977
        %v1499 = vmul.f32 %v499, %v983
        %v1500 = vmul.f32 %v505, %v989
        %v1501 = vmul.f32 %v511, %v995
        %v1502 = vmul.f32 %v517, %v1001
        %v1503 = vmul.f32 %v523, %v1007
        %v1504 = vmul.f32 %v529, %v1013
        %v1505 = vmul.f32 %v535, %v1019
        %v1506 = vmul.f32 %v541, %v1025
        %v1507 = vmul.f32 %v547, %v1031
        %v1508 = vmul.f32 %v553, %v1037
        %v1509 = vmul.f32 %v559, %v1043
        %v1510 = vmul.f32 %v565, %v1049
        %v1511 = vmul.f32 %v571, %v1055
        %v1512 = vmul.f32 %v577, %v1061
        %v1513 = vmul.f32 %v583, %v1067
        %v1514 = vmul.f32 %v589, %v1073
        %v1515 = vmul.f32 %v595, %v1079
        %v1516 = vmul.f32 %v601, %v1085
        %v1517 = vmul.f32 %v607, %v1091
        %v1518 = vmul.f32 %v613, %v1097
        %v1519 = vmul.f32 %v619, %v1103
        %v1520 = vmul.f32 %v625, %v1109
        %v1521 = vmul.f32 %v631, %v1115
        %v1522 = vmul.f32 %v637, %v1121
        %v1523 = vmul.f32 %v643, %v1127
        %v1524 = vmul.f32 %v649, %v1133
        %v1525 = vmul.f32 %v655, %v1139
        %1526 = vadd.xlane.f32.xlu0 %v1494
        %v1527 = vpop.xlane.xlu0 %1526
        %1528 = vadd.xlane.f32.xlu0 %v1495
        %v1529 = vpop.xlane.xlu0 %1528
        %1530 = vadd.xlane.f32.xlu0 %v1496
        %v1531 = vpop.xlane.xlu0 %1530
        %1532 = vadd.xlane.f32.xlu0 %v1497
        %v1533 = vpop.xlane.xlu0 %1532
        %1534 = vadd.xlane.f32.xlu0 %v1498
        %v1535 = vpop.xlane.xlu0 %1534
        %1536 = vadd.xlane.f32.xlu0 %v1499
        %v1537 = vpop.xlane.xlu0 %1536
        %1538 = vadd.xlane.f32.xlu0 %v1500
        %v1539 = vpop.xlane.xlu0 %1538
        %1540 = vadd.xlane.f32.xlu0 %v1501
        %v1541 = vpop.xlane.xlu0 %1540
        %1542 = vadd.xlane.f32.xlu0 %v1502
        %v1543 = vpop.xlane.xlu0 %1542
        %1544 = vadd.xlane.f32.xlu0 %v1503
        %v1545 = vpop.xlane.xlu0 %1544
        %1546 = vadd.xlane.f32.xlu0 %v1504
        %v1547 = vpop.xlane.xlu0 %1546
        %1548 = vadd.xlane.f32.xlu0 %v1505
        %v1549 = vpop.xlane.xlu0 %1548
        %1550 = vadd.xlane.f32.xlu0 %v1506
        %v1551 = vpop.xlane.xlu0 %1550
        %1552 = vadd.xlane.f32.xlu0 %v1507
        %v1553 = vpop.xlane.xlu0 %1552
        %1554 = vadd.xlane.f32.xlu0 %v1508
        %v1555 = vpop.xlane.xlu0 %1554
        %1556 = vadd.xlane.f32.xlu0 %v1509
        %v1557 = vpop.xlane.xlu0 %1556
        %1558 = vadd.xlane.f32.xlu0 %v1510
        %v1559 = vpop.xlane.xlu0 %1558
        %1560 = vadd.xlane.f32.xlu0 %v1511
        %v1561 = vpop.xlane.xlu0 %1560
        %1562 = vadd.xlane.f32.xlu0 %v1512
        %v1563 = vpop.xlane.xlu0 %1562
        %1564 = vadd.xlane.f32.xlu0 %v1513
        %v1565 = vpop.xlane.xlu0 %1564
        %1566 = vadd.xlane.f32.xlu0 %v1514
        %v1567 = vpop.xlane.xlu0 %1566
        %1568 = vadd.xlane.f32.xlu0 %v1515
        %v1569 = vpop.xlane.xlu0 %1568
        %1570 = vadd.xlane.f32.xlu0 %v1516
        %v1571 = vpop.xlane.xlu0 %1570
        %1572 = vadd.xlane.f32.xlu0 %v1517
        %v1573 = vpop.xlane.xlu0 %1572
        %1574 = vadd.xlane.f32.xlu0 %v1518
        %v1575 = vpop.xlane.xlu0 %1574
        %1576 = vadd.xlane.f32.xlu0 %v1519
        %v1577 = vpop.xlane.xlu0 %1576
        %1578 = vadd.xlane.f32.xlu0 %v1520
        %v1579 = vpop.xlane.xlu0 %1578
        %1580 = vadd.xlane.f32.xlu0 %v1521
        %v1581 = vpop.xlane.xlu0 %1580
        %1582 = vadd.xlane.f32.xlu0 %v1522
        %v1583 = vpop.xlane.xlu0 %1582
        %1584 = vadd.xlane.f32.xlu0 %v1523
        %v1585 = vpop.xlane.xlu0 %1584
        %1586 = vadd.xlane.f32.xlu0 %v1524
        %v1587 = vpop.xlane.xlu0 %1586
        %1588 = vadd.xlane.f32.xlu0 %v1525
        %v1589 = vpop.xlane.xlu0 %1588
        %v1590 = vmul.f32 %v1527, 0.088388346
        %v1591 = vmul.f32 %v1529, 0.088388346
        %v1592 = vmul.f32 %v1531, 0.088388346
        %v1593 = vmul.f32 %v1533, 0.088388346
        %v1594 = vmul.f32 %v1535, 0.088388346
        %v1595 = vmul.f32 %v1537, 0.088388346
        %v1596 = vmul.f32 %v1539, 0.088388346
        %v1597 = vmul.f32 %v1541, 0.088388346
        %v1598 = vmul.f32 %v1543, 0.088388346
        %v1599 = vmul.f32 %v1545, 0.088388346
        %v1600 = vmul.f32 %v1547, 0.088388346
        %v1601 = vmul.f32 %v1549, 0.088388346
        %v1602 = vmul.f32 %v1551, 0.088388346
        %v1603 = vmul.f32 %v1553, 0.088388346
        %v1604 = vmul.f32 %v1555, 0.088388346
        %v1605 = vmul.f32 %v1557, 0.088388346
        %v1606 = vmul.f32 %v1559, 0.088388346
        %v1607 = vmul.f32 %v1561, 0.088388346
        %v1608 = vmul.f32 %v1563, 0.088388346
        %v1609 = vmul.f32 %v1565, 0.088388346
        %v1610 = vmul.f32 %v1567, 0.088388346
        %v1611 = vmul.f32 %v1569, 0.088388346
        %v1612 = vmul.f32 %v1571, 0.088388346
        %v1613 = vmul.f32 %v1573, 0.088388346
        %v1614 = vmul.f32 %v1575, 0.088388346
        %v1615 = vmul.f32 %v1577, 0.088388346
        %v1616 = vmul.f32 %v1579, 0.088388346
        %v1617 = vmul.f32 %v1581, 0.088388346
        %v1618 = vmul.f32 %v1583, 0.088388346
        %v1619 = vmul.f32 %v1585, 0.088388346
        %v1620 = vmul.f32 %v1587, 0.088388346
        %v1621 = vmul.f32 %v1589, 0.088388346
        %v1622 = vmul.f32 %v951, %v471
        %v1623 = vmul.f32 %v957, %v477
        %v1624 = vmul.f32 %v963, %v483
        %v1625 = vmul.f32 %v969, %v489
        %v1626 = vmul.f32 %v975, %v495
        %v1627 = vmul.f32 %v981, %v501
        %v1628 = vmul.f32 %v987, %v507
        %v1629 = vmul.f32 %v993, %v513
        %v1630 = vmul.f32 %v999, %v519
        %v1631 = vmul.f32 %v1005, %v525
        %v1632 = vmul.f32 %v1011, %v531
        %v1633 = vmul.f32 %v1017, %v537
        %v1634 = vmul.f32 %v1023, %v543
        %v1635 = vmul.f32 %v1029, %v549
        %v1636 = vmul.f32 %v1035, %v555
        %v1637 = vmul.f32 %v1041, %v561
        %v1638 = vmul.f32 %v1047, %v567
        %v1639 = vmul.f32 %v1053, %v573
        %v1640 = vmul.f32 %v1059, %v579
        %v1641 = vmul.f32 %v1065, %v585
        %v1642 = vmul.f32 %v1071, %v591
        %v1643 = vmul.f32 %v1077, %v597
        %v1644 = vmul.f32 %v1083, %v603
        %v1645 = vmul.f32 %v1089, %v609
        %v1646 = vmul.f32 %v1095, %v615
        %v1647 = vmul.f32 %v1101, %v621
        %v1648 = vmul.f32 %v1107, %v627
        %v1649 = vmul.f32 %v1113, %v633
        %v1650 = vmul.f32 %v1119, %v639
        %v1651 = vmul.f32 %v1125, %v645
        %v1652 = vmul.f32 %v1131, %v651
        %v1653 = vmul.f32 %v1137, %v657
        %1654 = vadd.xlane.f32.xlu0 %v1622
        %v1655 = vpop.xlane.xlu0 %1654
        %1656 = vadd.xlane.f32.xlu0 %v1623
        %v1657 = vpop.xlane.xlu0 %1656
        %1658 = vadd.xlane.f32.xlu0 %v1624
        %v1659 = vpop.xlane.xlu0 %1658
        %1660 = vadd.xlane.f32.xlu0 %v1625
        %v1661 = vpop.xlane.xlu0 %1660
        %1662 = vadd.xlane.f32.xlu0 %v1626
        %v1663 = vpop.xlane.xlu0 %1662
        %1664 = vadd.xlane.f32.xlu0 %v1627
        %v1665 = vpop.xlane.xlu0 %1664
        %1666 = vadd.xlane.f32.xlu0 %v1628
        %v1667 = vpop.xlane.xlu0 %1666
        %1668 = vadd.xlane.f32.xlu0 %v1629
        %v1669 = vpop.xlane.xlu0 %1668
        %1670 = vadd.xlane.f32.xlu0 %v1630
        %v1671 = vpop.xlane.xlu0 %1670
        %1672 = vadd.xlane.f32.xlu0 %v1631
        %v1673 = vpop.xlane.xlu0 %1672
        %1674 = vadd.xlane.f32.xlu0 %v1632
        %v1675 = vpop.xlane.xlu0 %1674
        %1676 = vadd.xlane.f32.xlu0 %v1633
        %v1677 = vpop.xlane.xlu0 %1676
        %1678 = vadd.xlane.f32.xlu0 %v1634
        %v1679 = vpop.xlane.xlu0 %1678
        %1680 = vadd.xlane.f32.xlu0 %v1635
        %v1681 = vpop.xlane.xlu0 %1680
        %1682 = vadd.xlane.f32.xlu0 %v1636
        %v1683 = vpop.xlane.xlu0 %1682
        %1684 = vadd.xlane.f32.xlu0 %v1637
        %v1685 = vpop.xlane.xlu0 %1684
        %1686 = vadd.xlane.f32.xlu0 %v1638
        %v1687 = vpop.xlane.xlu0 %1686
        %1688 = vadd.xlane.f32.xlu0 %v1639
        %v1689 = vpop.xlane.xlu0 %1688
        %1690 = vadd.xlane.f32.xlu0 %v1640
        %v1691 = vpop.xlane.xlu0 %1690
        %1692 = vadd.xlane.f32.xlu0 %v1641
        %v1693 = vpop.xlane.xlu0 %1692
        %1694 = vadd.xlane.f32.xlu0 %v1642
        %v1695 = vpop.xlane.xlu0 %1694
        %1696 = vadd.xlane.f32.xlu0 %v1643
        %v1697 = vpop.xlane.xlu0 %1696
        %1698 = vadd.xlane.f32.xlu0 %v1644
        %v1699 = vpop.xlane.xlu0 %1698
        %1700 = vadd.xlane.f32.xlu0 %v1645
        %v1701 = vpop.xlane.xlu0 %1700
        %1702 = vadd.xlane.f32.xlu0 %v1646
        %v1703 = vpop.xlane.xlu0 %1702
        %1704 = vadd.xlane.f32.xlu0 %v1647
        %v1705 = vpop.xlane.xlu0 %1704
        %1706 = vadd.xlane.f32.xlu0 %v1648
        %v1707 = vpop.xlane.xlu0 %1706
        %1708 = vadd.xlane.f32.xlu0 %v1649
        %v1709 = vpop.xlane.xlu0 %1708
        %1710 = vadd.xlane.f32.xlu0 %v1650
        %v1711 = vpop.xlane.xlu0 %1710
        %1712 = vadd.xlane.f32.xlu0 %v1651
        %v1713 = vpop.xlane.xlu0 %1712
        %1714 = vadd.xlane.f32.xlu0 %v1652
        %v1715 = vpop.xlane.xlu0 %1714
        %1716 = vadd.xlane.f32.xlu0 %v1653
        %v1717 = vpop.xlane.xlu0 %1716
        %v1718 = vmul.f32 %v1655, 0.088388346
        %v1719 = vmul.f32 %v1657, 0.088388346
        %v1720 = vmul.f32 %v1659, 0.088388346
        %v1721 = vmul.f32 %v1661, 0.088388346
        %v1722 = vmul.f32 %v1663, 0.088388346
        %v1723 = vmul.f32 %v1665, 0.088388346
        %v1724 = vmul.f32 %v1667, 0.088388346
        %v1725 = vmul.f32 %v1669, 0.088388346
        %v1726 = vmul.f32 %v1671, 0.088388346
        %v1727 = vmul.f32 %v1673, 0.088388346
        %v1728 = vmul.f32 %v1675, 0.088388346
        %v1729 = vmul.f32 %v1677, 0.088388346
        %v1730 = vmul.f32 %v1679, 0.088388346
        %v1731 = vmul.f32 %v1681, 0.088388346
        %v1732 = vmul.f32 %v1683, 0.088388346
        %v1733 = vmul.f32 %v1685, 0.088388346
        %v1734 = vmul.f32 %v1687, 0.088388346
        %v1735 = vmul.f32 %v1689, 0.088388346
        %v1736 = vmul.f32 %v1691, 0.088388346
        %v1737 = vmul.f32 %v1693, 0.088388346
        %v1738 = vmul.f32 %v1695, 0.088388346
        %v1739 = vmul.f32 %v1697, 0.088388346
        %v1740 = vmul.f32 %v1699, 0.088388346
        %v1741 = vmul.f32 %v1701, 0.088388346
        %v1742 = vmul.f32 %v1703, 0.088388346
        %v1743 = vmul.f32 %v1705, 0.088388346
        %v1744 = vmul.f32 %v1707, 0.088388346
        %v1745 = vmul.f32 %v1709, 0.088388346
        %v1746 = vmul.f32 %v1711, 0.088388346
        %v1747 = vmul.f32 %v1713, 0.088388346
        %v1748 = vmul.f32 %v1715, 0.088388346
        %v1749 = vmul.f32 %v1717, 0.088388346
        %v1750 = vmul.f32 %v951, %v953
        %v1751 = vmul.f32 %v957, %v959
        %v1752 = vmul.f32 %v963, %v965
        %v1753 = vmul.f32 %v969, %v971
        %v1754 = vmul.f32 %v975, %v977
        %v1755 = vmul.f32 %v981, %v983
        %v1756 = vmul.f32 %v987, %v989
        %v1757 = vmul.f32 %v993, %v995
        %v1758 = vmul.f32 %v999, %v1001
        %v1759 = vmul.f32 %v1005, %v1007
        %v1760 = vmul.f32 %v1011, %v1013
        %v1761 = vmul.f32 %v1017, %v1019
        %v1762 = vmul.f32 %v1023, %v1025
        %v1763 = vmul.f32 %v1029, %v1031
        %v1764 = vmul.f32 %v1035, %v1037
        %v1765 = vmul.f32 %v1041, %v1043
        %v1766 = vmul.f32 %v1047, %v1049
        %v1767 = vmul.f32 %v1053, %v1055
        %v1768 = vmul.f32 %v1059, %v1061
        %v1769 = vmul.f32 %v1065, %v1067
        %v1770 = vmul.f32 %v1071, %v1073
        %v1771 = vmul.f32 %v1077, %v1079
        %v1772 = vmul.f32 %v1083, %v1085
        %v1773 = vmul.f32 %v1089, %v1091
        %v1774 = vmul.f32 %v1095, %v1097
        %v1775 = vmul.f32 %v1101, %v1103
        %v1776 = vmul.f32 %v1107, %v1109
        %v1777 = vmul.f32 %v1113, %v1115
        %v1778 = vmul.f32 %v1119, %v1121
        %v1779 = vmul.f32 %v1125, %v1127
        %v1780 = vmul.f32 %v1131, %v1133
        %v1781 = vmul.f32 %v1137, %v1139
        %1782 = vadd.xlane.f32.xlu0 %v1750
        %v1783 = vpop.xlane.xlu0 %1782
        %1784 = vadd.xlane.f32.xlu0 %v1751
        %v1785 = vpop.xlane.xlu0 %1784
        %1786 = vadd.xlane.f32.xlu0 %v1752
        %v1787 = vpop.xlane.xlu0 %1786
        %1788 = vadd.xlane.f32.xlu0 %v1753
        %v1789 = vpop.xlane.xlu0 %1788
        %1790 = vadd.xlane.f32.xlu0 %v1754
        %v1791 = vpop.xlane.xlu0 %1790
        %1792 = vadd.xlane.f32.xlu0 %v1755
        %v1793 = vpop.xlane.xlu0 %1792
        %1794 = vadd.xlane.f32.xlu0 %v1756
        %v1795 = vpop.xlane.xlu0 %1794
        %1796 = vadd.xlane.f32.xlu0 %v1757
        %v1797 = vpop.xlane.xlu0 %1796
        %1798 = vadd.xlane.f32.xlu0 %v1758
        %v1799 = vpop.xlane.xlu0 %1798
        %1800 = vadd.xlane.f32.xlu0 %v1759
        %v1801 = vpop.xlane.xlu0 %1800
        %1802 = vadd.xlane.f32.xlu0 %v1760
        %v1803 = vpop.xlane.xlu0 %1802
        %1804 = vadd.xlane.f32.xlu0 %v1761
        %v1805 = vpop.xlane.xlu0 %1804
        %1806 = vadd.xlane.f32.xlu0 %v1762
        %v1807 = vpop.xlane.xlu0 %1806
        %1808 = vadd.xlane.f32.xlu0 %v1763
        %v1809 = vpop.xlane.xlu0 %1808
        %1810 = vadd.xlane.f32.xlu0 %v1764
        %v1811 = vpop.xlane.xlu0 %1810
        %1812 = vadd.xlane.f32.xlu0 %v1765
        %v1813 = vpop.xlane.xlu0 %1812
        %1814 = vadd.xlane.f32.xlu0 %v1766
        %v1815 = vpop.xlane.xlu0 %1814
        %1816 = vadd.xlane.f32.xlu0 %v1767
        %v1817 = vpop.xlane.xlu0 %1816
        %1818 = vadd.xlane.f32.xlu0 %v1768
        %v1819 = vpop.xlane.xlu0 %1818
        %1820 = vadd.xlane.f32.xlu0 %v1769
        %v1821 = vpop.xlane.xlu0 %1820
        %1822 = vadd.xlane.f32.xlu0 %v1770
        %v1823 = vpop.xlane.xlu0 %1822
        %1824 = vadd.xlane.f32.xlu0 %v1771
        %v1825 = vpop.xlane.xlu0 %1824
        %1826 = vadd.xlane.f32.xlu0 %v1772
        %v1827 = vpop.xlane.xlu0 %1826
        %1828 = vadd.xlane.f32.xlu0 %v1773
        %v1829 = vpop.xlane.xlu0 %1828
        %1830 = vadd.xlane.f32.xlu0 %v1774
        %v1831 = vpop.xlane.xlu0 %1830
        %1832 = vadd.xlane.f32.xlu0 %v1775
        %v1833 = vpop.xlane.xlu0 %1832
        %1834 = vadd.xlane.f32.xlu0 %v1776
        %v1835 = vpop.xlane.xlu0 %1834
        %1836 = vadd.xlane.f32.xlu0 %v1777
        %v1837 = vpop.xlane.xlu0 %1836
        %1838 = vadd.xlane.f32.xlu0 %v1778
        %v1839 = vpop.xlane.xlu0 %1838
        %1840 = vadd.xlane.f32.xlu0 %v1779
        %v1841 = vpop.xlane.xlu0 %1840
        %1842 = vadd.xlane.f32.xlu0 %v1780
        %v1843 = vpop.xlane.xlu0 %1842
        %1844 = vadd.xlane.f32.xlu0 %v1781
        %v1845 = vpop.xlane.xlu0 %1844
        %v1846 = vmul.f32 %v1783, 0.088388346
        %v1847 = vmul.f32 %v1785, 0.088388346
        %v1848 = vmul.f32 %v1787, 0.088388346
        %v1849 = vmul.f32 %v1789, 0.088388346
        %v1850 = vmul.f32 %v1791, 0.088388346
        %v1851 = vmul.f32 %v1793, 0.088388346
        %v1852 = vmul.f32 %v1795, 0.088388346
        %v1853 = vmul.f32 %v1797, 0.088388346
        %v1854 = vmul.f32 %v1799, 0.088388346
        %v1855 = vmul.f32 %v1801, 0.088388346
        %v1856 = vmul.f32 %v1803, 0.088388346
        %v1857 = vmul.f32 %v1805, 0.088388346
        %v1858 = vmul.f32 %v1807, 0.088388346
        %v1859 = vmul.f32 %v1809, 0.088388346
        %v1860 = vmul.f32 %v1811, 0.088388346
        %v1861 = vmul.f32 %v1813, 0.088388346
        %v1862 = vmul.f32 %v1815, 0.088388346
        %v1863 = vmul.f32 %v1817, 0.088388346
        %v1864 = vmul.f32 %v1819, 0.088388346
        %v1865 = vmul.f32 %v1821, 0.088388346
        %v1866 = vmul.f32 %v1823, 0.088388346
        %v1867 = vmul.f32 %v1825, 0.088388346
        %v1868 = vmul.f32 %v1827, 0.088388346
        %v1869 = vmul.f32 %v1829, 0.088388346
        %v1870 = vmul.f32 %v1831, 0.088388346
        %v1871 = vmul.f32 %v1833, 0.088388346
        %v1872 = vmul.f32 %v1835, 0.088388346
        %v1873 = vmul.f32 %v1837, 0.088388346
        %v1874 = vmul.f32 %v1839, 0.088388346
        %v1875 = vmul.f32 %v1841, 0.088388346
        %v1876 = vmul.f32 %v1843, 0.088388346
        %v1877 = vmul.f32 %v1845, 0.088388346
        %v1878 = vsub.f32 %v1462, %v1590
        %v1879 = vsub.f32 %v1463, %v1591
        %v1880 = vsub.f32 %v1464, %v1592
        %v1881 = vsub.f32 %v1465, %v1593
        %v1882 = vsub.f32 %v1466, %v1594
        %v1883 = vsub.f32 %v1467, %v1595
        %v1884 = vsub.f32 %v1468, %v1596
        %v1885 = vsub.f32 %v1469, %v1597
        %v1886 = vsub.f32 %v1470, %v1598
        %v1887 = vsub.f32 %v1471, %v1599
        %v1888 = vsub.f32 %v1472, %v1600
        %v1889 = vsub.f32 %v1473, %v1601
        %v1890 = vsub.f32 %v1474, %v1602
        %v1891 = vsub.f32 %v1475, %v1603
        %v1892 = vsub.f32 %v1476, %v1604
        %v1893 = vsub.f32 %v1477, %v1605
        %v1894 = vsub.f32 %v1478, %v1606
        %v1895 = vsub.f32 %v1479, %v1607
        %v1896 = vsub.f32 %v1480, %v1608
        %v1897 = vsub.f32 %v1481, %v1609
        %v1898 = vsub.f32 %v1482, %v1610
        %v1899 = vsub.f32 %v1483, %v1611
        %v1900 = vsub.f32 %v1484, %v1612
        %v1901 = vsub.f32 %v1485, %v1613
        %v1902 = vsub.f32 %v1486, %v1614
        %v1903 = vsub.f32 %v1487, %v1615
        %v1904 = vsub.f32 %v1488, %v1616
        %v1905 = vsub.f32 %v1489, %v1617
        %v1906 = vsub.f32 %v1490, %v1618
        %v1907 = vsub.f32 %v1491, %v1619
        %v1908 = vsub.f32 %v1492, %v1620
        %v1909 = vsub.f32 %v1493, %v1621
        %v1910 = vxor.u32 %v1878, 2147483648
        %v1911 = vxor.u32 %v1879, 2147483648
        %v1912 = vxor.u32 %v1880, 2147483648
        %v1913 = vxor.u32 %v1881, 2147483648
        %v1914 = vxor.u32 %v1882, 2147483648
        %v1915 = vxor.u32 %v1883, 2147483648
        %v1916 = vxor.u32 %v1884, 2147483648
        %v1917 = vxor.u32 %v1885, 2147483648
        %v1918 = vxor.u32 %v1886, 2147483648
        %v1919 = vxor.u32 %v1887, 2147483648
        %v1920 = vxor.u32 %v1888, 2147483648
        %v1921 = vxor.u32 %v1889, 2147483648
        %v1922 = vxor.u32 %v1890, 2147483648
        %v1923 = vxor.u32 %v1891, 2147483648
        %v1924 = vxor.u32 %v1892, 2147483648
        %v1925 = vxor.u32 %v1893, 2147483648
        %v1926 = vxor.u32 %v1894, 2147483648
        %v1927 = vxor.u32 %v1895, 2147483648
        %v1928 = vxor.u32 %v1896, 2147483648
        %v1929 = vxor.u32 %v1897, 2147483648
        %v1930 = vxor.u32 %v1898, 2147483648
        %v1931 = vxor.u32 %v1899, 2147483648
        %v1932 = vxor.u32 %v1900, 2147483648
        %v1933 = vxor.u32 %v1901, 2147483648
        %v1934 = vxor.u32 %v1902, 2147483648
        %v1935 = vxor.u32 %v1903, 2147483648
        %v1936 = vxor.u32 %v1904, 2147483648
        %v1937 = vxor.u32 %v1905, 2147483648
        %v1938 = vxor.u32 %v1906, 2147483648
        %v1939 = vxor.u32 %v1907, 2147483648
        %v1940 = vxor.u32 %v1908, 2147483648
        %v1941 = vxor.u32 %v1909, 2147483648
        %v1942 = vmul.f32 %v1910, 1.442695
        %v1943 = vpow.pop %v1942
        %v1944 = vmul.f32 %v1911, 1.442695
        %v1945 = vpow.pop %v1944
        %v1946 = vmul.f32 %v1912, 1.442695
        %v1947 = vpow.pop %v1946
        %v1948 = vmul.f32 %v1913, 1.442695
        %v1949 = vpow.pop %v1948
        %v1950 = vmul.f32 %v1914, 1.442695
        %v1951 = vpow.pop %v1950
        %v1952 = vmul.f32 %v1915, 1.442695
        %v1953 = vpow.pop %v1952
        %v1954 = vmul.f32 %v1916, 1.442695
        %v1955 = vpow.pop %v1954
        %v1956 = vmul.f32 %v1917, 1.442695
        %v1957 = vpow.pop %v1956
        %v1958 = vmul.f32 %v1918, 1.442695
        %v1959 = vpow.pop %v1958
        %v1960 = vmul.f32 %v1919, 1.442695
        %v1961 = vpow.pop %v1960
        %v1962 = vmul.f32 %v1920, 1.442695
        %v1963 = vpow.pop %v1962
        %v1964 = vmul.f32 %v1921, 1.442695
        %v1965 = vpow.pop %v1964
        %v1966 = vmul.f32 %v1922, 1.442695
        %v1967 = vpow.pop %v1966
        %v1968 = vmul.f32 %v1923, 1.442695
        %v1969 = vpow.pop %v1968
        %v1970 = vmul.f32 %v1924, 1.442695
        %v1971 = vpow.pop %v1970
        %v1972 = vmul.f32 %v1925, 1.442695
        %v1973 = vpow.pop %v1972
        %v1974 = vmul.f32 %v1926, 1.442695
        %v1975 = vpow.pop %v1974
        %v1976 = vmul.f32 %v1927, 1.442695
        %v1977 = vpow.pop %v1976
        %v1978 = vmul.f32 %v1928, 1.442695
        %v1979 = vpow.pop %v1978
        %v1980 = vmul.f32 %v1929, 1.442695
        %v1981 = vpow.pop %v1980
        %v1982 = vmul.f32 %v1930, 1.442695
        %v1983 = vpow.pop %v1982
        %v1984 = vmul.f32 %v1931, 1.442695
        %v1985 = vpow.pop %v1984
        %v1986 = vmul.f32 %v1932, 1.442695
        %v1987 = vpow.pop %v1986
        %v1988 = vmul.f32 %v1933, 1.442695
        %v1989 = vpow.pop %v1988
        %v1990 = vmul.f32 %v1934, 1.442695
        %v1991 = vpow.pop %v1990
        %v1992 = vmul.f32 %v1935, 1.442695
        %v1993 = vpow.pop %v1992
        %v1994 = vmul.f32 %v1936, 1.442695
        %v1995 = vpow.pop %v1994
        %v1996 = vmul.f32 %v1937, 1.442695
        %v1997 = vpow.pop %v1996
        %v1998 = vmul.f32 %v1938, 1.442695
        %v1999 = vpow.pop %v1998
        %v2000 = vmul.f32 %v1939, 1.442695
        %v2001 = vpow.pop %v2000
        %v2002 = vmul.f32 %v1940, 1.442695
        %v2003 = vpow.pop %v2002
        %v2004 = vmul.f32 %v1941, 1.442695
        %v2005 = vpow.pop %v2004
        %v2006 = vadd.f32 %v1943, 1.0
        %v2007 = vadd.f32 %v1945, 1.0
        %v2008 = vadd.f32 %v1947, 1.0
        %v2009 = vadd.f32 %v1949, 1.0
        %v2010 = vadd.f32 %v1951, 1.0
        %v2011 = vadd.f32 %v1953, 1.0
        %v2012 = vadd.f32 %v1955, 1.0
        %v2013 = vadd.f32 %v1957, 1.0
        %v2014 = vadd.f32 %v1959, 1.0
        %v2015 = vadd.f32 %v1961, 1.0
        %v2016 = vadd.f32 %v1963, 1.0
        %v2017 = vadd.f32 %v1965, 1.0
        %v2018 = vadd.f32 %v1967, 1.0
        %v2019 = vadd.f32 %v1969, 1.0
        %v2020 = vadd.f32 %v1971, 1.0
        %v2021 = vadd.f32 %v1973, 1.0
        %v2022 = vadd.f32 %v1975, 1.0
        %v2023 = vadd.f32 %v1977, 1.0
        %v2024 = vadd.f32 %v1979, 1.0
        %v2025 = vadd.f32 %v1981, 1.0
        %v2026 = vadd.f32 %v1983, 1.0
        %v2027 = vadd.f32 %v1985, 1.0
        %v2028 = vadd.f32 %v1987, 1.0
        %v2029 = vadd.f32 %v1989, 1.0
        %v2030 = vadd.f32 %v1991, 1.0
        %v2031 = vadd.f32 %v1993, 1.0
        %v2032 = vadd.f32 %v1995, 1.0
        %v2033 = vadd.f32 %v1997, 1.0
        %v2034 = vadd.f32 %v1999, 1.0
        %v2035 = vadd.f32 %v2001, 1.0
        %v2036 = vadd.f32 %v2003, 1.0
        %v2037 = vadd.f32 %v2005, 1.0
        %v2038 = vrcp.pop %v2006
        %v2039 = vmul.f32 1.0, %v2038
        %v2040 = vrcp.pop %v2007
        %v2041 = vmul.f32 1.0, %v2040
        %v2042 = vrcp.pop %v2008
        %v2043 = vmul.f32 1.0, %v2042
        %v2044 = vrcp.pop %v2009
        %v2045 = vmul.f32 1.0, %v2044
        %v2046 = vrcp.pop %v2010
        %v2047 = vmul.f32 1.0, %v2046
        %v2048 = vrcp.pop %v2011
        %v2049 = vmul.f32 1.0, %v2048
        %v2050 = vrcp.pop %v2012
        %v2051 = vmul.f32 1.0, %v2050
        %v2052 = vrcp.pop %v2013
        %v2053 = vmul.f32 1.0, %v2052
        %v2054 = vrcp.pop %v2014
        %v2055 = vmul.f32 1.0, %v2054
        %v2056 = vrcp.pop %v2015
        %v2057 = vmul.f32 1.0, %v2056
        %v2058 = vrcp.pop %v2016
        %v2059 = vmul.f32 1.0, %v2058
        %v2060 = vrcp.pop %v2017
        %v2061 = vmul.f32 1.0, %v2060
        %v2062 = vrcp.pop %v2018
        %v2063 = vmul.f32 1.0, %v2062
        %v2064 = vrcp.pop %v2019
        %v2065 = vmul.f32 1.0, %v2064
        %v2066 = vrcp.pop %v2020
        %v2067 = vmul.f32 1.0, %v2066
        %v2068 = vrcp.pop %v2021
        %v2069 = vmul.f32 1.0, %v2068
        %v2070 = vrcp.pop %v2022
        %v2071 = vmul.f32 1.0, %v2070
        %v2072 = vrcp.pop %v2023
        %v2073 = vmul.f32 1.0, %v2072
        %v2074 = vrcp.pop %v2024
        %v2075 = vmul.f32 1.0, %v2074
        %v2076 = vrcp.pop %v2025
        %v2077 = vmul.f32 1.0, %v2076
        %v2078 = vrcp.pop %v2026
        %v2079 = vmul.f32 1.0, %v2078
        %v2080 = vrcp.pop %v2027
        %v2081 = vmul.f32 1.0, %v2080
        %v2082 = vrcp.pop %v2028
        %v2083 = vmul.f32 1.0, %v2082
        %v2084 = vrcp.pop %v2029
        %v2085 = vmul.f32 1.0, %v2084
        %v2086 = vrcp.pop %v2030
        %v2087 = vmul.f32 1.0, %v2086
        %v2088 = vrcp.pop %v2031
        %v2089 = vmul.f32 1.0, %v2088
        %v2090 = vrcp.pop %v2032
        %v2091 = vmul.f32 1.0, %v2090
        %v2092 = vrcp.pop %v2033
        %v2093 = vmul.f32 1.0, %v2092
        %v2094 = vrcp.pop %v2034
        %v2095 = vmul.f32 1.0, %v2094
        %v2096 = vrcp.pop %v2035
        %v2097 = vmul.f32 1.0, %v2096
        %v2098 = vrcp.pop %v2036
        %v2099 = vmul.f32 1.0, %v2098
        %v2100 = vrcp.pop %v2037
        %v2101 = vmul.f32 1.0, %v2100
        %v2102 = vsub.f32 1.0, %v2039
        %v2103 = vsub.f32 1.0, %v2041
        %v2104 = vsub.f32 1.0, %v2043
        %v2105 = vsub.f32 1.0, %v2045
        %v2106 = vsub.f32 1.0, %v2047
        %v2107 = vsub.f32 1.0, %v2049
        %v2108 = vsub.f32 1.0, %v2051
        %v2109 = vsub.f32 1.0, %v2053
        %v2110 = vsub.f32 1.0, %v2055
        %v2111 = vsub.f32 1.0, %v2057
        %v2112 = vsub.f32 1.0, %v2059
        %v2113 = vsub.f32 1.0, %v2061
        %v2114 = vsub.f32 1.0, %v2063
        %v2115 = vsub.f32 1.0, %v2065
        %v2116 = vsub.f32 1.0, %v2067
        %v2117 = vsub.f32 1.0, %v2069
        %v2118 = vsub.f32 1.0, %v2071
        %v2119 = vsub.f32 1.0, %v2073
        %v2120 = vsub.f32 1.0, %v2075
        %v2121 = vsub.f32 1.0, %v2077
        %v2122 = vsub.f32 1.0, %v2079
        %v2123 = vsub.f32 1.0, %v2081
        %v2124 = vsub.f32 1.0, %v2083
        %v2125 = vsub.f32 1.0, %v2085
        %v2126 = vsub.f32 1.0, %v2087
        %v2127 = vsub.f32 1.0, %v2089
        %v2128 = vsub.f32 1.0, %v2091
        %v2129 = vsub.f32 1.0, %v2093
        %v2130 = vsub.f32 1.0, %v2095
        %v2131 = vsub.f32 1.0, %v2097
        %v2132 = vsub.f32 1.0, %v2099
        %v2133 = vsub.f32 1.0, %v2101
        %v2134 = vsub.f32 %v1718, %v1846
        %v2135 = vsub.f32 %v1719, %v1847
        %v2136 = vsub.f32 %v1720, %v1848
        %v2137 = vsub.f32 %v1721, %v1849
        %v2138 = vsub.f32 %v1722, %v1850
        %v2139 = vsub.f32 %v1723, %v1851
        %v2140 = vsub.f32 %v1724, %v1852
        %v2141 = vsub.f32 %v1725, %v1853
        %v2142 = vsub.f32 %v1726, %v1854
        %v2143 = vsub.f32 %v1727, %v1855
        %v2144 = vsub.f32 %v1728, %v1856
        %v2145 = vsub.f32 %v1729, %v1857
        %v2146 = vsub.f32 %v1730, %v1858
        %v2147 = vsub.f32 %v1731, %v1859
        %v2148 = vsub.f32 %v1732, %v1860
        %v2149 = vsub.f32 %v1733, %v1861
        %v2150 = vsub.f32 %v1734, %v1862
        %v2151 = vsub.f32 %v1735, %v1863
        %v2152 = vsub.f32 %v1736, %v1864
        %v2153 = vsub.f32 %v1737, %v1865
        %v2154 = vsub.f32 %v1738, %v1866
        %v2155 = vsub.f32 %v1739, %v1867
        %v2156 = vsub.f32 %v1740, %v1868
        %v2157 = vsub.f32 %v1741, %v1869
        %v2158 = vsub.f32 %v1742, %v1870
        %v2159 = vsub.f32 %v1743, %v1871
        %v2160 = vsub.f32 %v1744, %v1872
        %v2161 = vsub.f32 %v1745, %v1873
        %v2162 = vsub.f32 %v1746, %v1874
        %v2163 = vsub.f32 %v1747, %v1875
        %v2164 = vsub.f32 %v1748, %v1876
        %v2165 = vsub.f32 %v1749, %v1877
        %v2166 = vxor.u32 %v2134, 2147483648
        %v2167 = vxor.u32 %v2135, 2147483648
        %v2168 = vxor.u32 %v2136, 2147483648
        %v2169 = vxor.u32 %v2137, 2147483648
        %v2170 = vxor.u32 %v2138, 2147483648
        %v2171 = vxor.u32 %v2139, 2147483648
        %v2172 = vxor.u32 %v2140, 2147483648
        %v2173 = vxor.u32 %v2141, 2147483648
        %v2174 = vxor.u32 %v2142, 2147483648
        %v2175 = vxor.u32 %v2143, 2147483648
        %v2176 = vxor.u32 %v2144, 2147483648
        %v2177 = vxor.u32 %v2145, 2147483648
        %v2178 = vxor.u32 %v2146, 2147483648
        %v2179 = vxor.u32 %v2147, 2147483648
        %v2180 = vxor.u32 %v2148, 2147483648
        %v2181 = vxor.u32 %v2149, 2147483648
        %v2182 = vxor.u32 %v2150, 2147483648
        %v2183 = vxor.u32 %v2151, 2147483648
        %v2184 = vxor.u32 %v2152, 2147483648
        %v2185 = vxor.u32 %v2153, 2147483648
        %v2186 = vxor.u32 %v2154, 2147483648
        %v2187 = vxor.u32 %v2155, 2147483648
        %v2188 = vxor.u32 %v2156, 2147483648
        %v2189 = vxor.u32 %v2157, 2147483648
        %v2190 = vxor.u32 %v2158, 2147483648
        %v2191 = vxor.u32 %v2159, 2147483648
        %v2192 = vxor.u32 %v2160, 2147483648
        %v2193 = vxor.u32 %v2161, 2147483648
        %v2194 = vxor.u32 %v2162, 2147483648
        %v2195 = vxor.u32 %v2163, 2147483648
        %v2196 = vxor.u32 %v2164, 2147483648
        %v2197 = vxor.u32 %v2165, 2147483648
        %v2198 = vmul.f32 %v2166, 1.442695
        %v2199 = vpow.pop %v2198
        %v2200 = vmul.f32 %v2167, 1.442695
        %v2201 = vpow.pop %v2200
        %v2202 = vmul.f32 %v2168, 1.442695
        %v2203 = vpow.pop %v2202
        %v2204 = vmul.f32 %v2169, 1.442695
        %v2205 = vpow.pop %v2204
        %v2206 = vmul.f32 %v2170, 1.442695
        %v2207 = vpow.pop %v2206
        %v2208 = vmul.f32 %v2171, 1.442695
        %v2209 = vpow.pop %v2208
        %v2210 = vmul.f32 %v2172, 1.442695
        %v2211 = vpow.pop %v2210
        %v2212 = vmul.f32 %v2173, 1.442695
        %v2213 = vpow.pop %v2212
        %v2214 = vmul.f32 %v2174, 1.442695
        %v2215 = vpow.pop %v2214
        %v2216 = vmul.f32 %v2175, 1.442695
        %v2217 = vpow.pop %v2216
        %v2218 = vmul.f32 %v2176, 1.442695
        %v2219 = vpow.pop %v2218
        %v2220 = vmul.f32 %v2177, 1.442695
        %v2221 = vpow.pop %v2220
        %v2222 = vmul.f32 %v2178, 1.442695
        %v2223 = vpow.pop %v2222
        %v2224 = vmul.f32 %v2179, 1.442695
        %v2225 = vpow.pop %v2224
        %v2226 = vmul.f32 %v2180, 1.442695
        %v2227 = vpow.pop %v2226
        %v2228 = vmul.f32 %v2181, 1.442695
        %v2229 = vpow.pop %v2228
        %v2230 = vmul.f32 %v2182, 1.442695
        %v2231 = vpow.pop %v2230
        %v2232 = vmul.f32 %v2183, 1.442695
        %v2233 = vpow.pop %v2232
        %v2234 = vmul.f32 %v2184, 1.442695
        %v2235 = vpow.pop %v2234
        %v2236 = vmul.f32 %v2185, 1.442695
        %v2237 = vpow.pop %v2236
        %v2238 = vmul.f32 %v2186, 1.442695
        %v2239 = vpow.pop %v2238
        %v2240 = vmul.f32 %v2187, 1.442695
        %v2241 = vpow.pop %v2240
        %v2242 = vmul.f32 %v2188, 1.442695
        %v2243 = vpow.pop %v2242
        %v2244 = vmul.f32 %v2189, 1.442695
        %v2245 = vpow.pop %v2244
        %v2246 = vmul.f32 %v2190, 1.442695
        %v2247 = vpow.pop %v2246
        %v2248 = vmul.f32 %v2191, 1.442695
        %v2249 = vpow.pop %v2248
        %v2250 = vmul.f32 %v2192, 1.442695
        %v2251 = vpow.pop %v2250
        %v2252 = vmul.f32 %v2193, 1.442695
        %v2253 = vpow.pop %v2252
        %v2254 = vmul.f32 %v2194, 1.442695
        %v2255 = vpow.pop %v2254
        %v2256 = vmul.f32 %v2195, 1.442695
        %v2257 = vpow.pop %v2256
        %v2258 = vmul.f32 %v2196, 1.442695
        %v2259 = vpow.pop %v2258
        %v2260 = vmul.f32 %v2197, 1.442695
        %v2261 = vpow.pop %v2260
        %v2262 = vadd.f32 %v2199, 1.0
        %v2263 = vadd.f32 %v2201, 1.0
        %v2264 = vadd.f32 %v2203, 1.0
        %v2265 = vadd.f32 %v2205, 1.0
        %v2266 = vadd.f32 %v2207, 1.0
        %v2267 = vadd.f32 %v2209, 1.0
        %v2268 = vadd.f32 %v2211, 1.0
        %v2269 = vadd.f32 %v2213, 1.0
        %v2270 = vadd.f32 %v2215, 1.0
        %v2271 = vadd.f32 %v2217, 1.0
        %v2272 = vadd.f32 %v2219, 1.0
        %v2273 = vadd.f32 %v2221, 1.0
        %v2274 = vadd.f32 %v2223, 1.0
        %v2275 = vadd.f32 %v2225, 1.0
        %v2276 = vadd.f32 %v2227, 1.0
        %v2277 = vadd.f32 %v2229, 1.0
        %v2278 = vadd.f32 %v2231, 1.0
        %v2279 = vadd.f32 %v2233, 1.0
        %v2280 = vadd.f32 %v2235, 1.0
        %v2281 = vadd.f32 %v2237, 1.0
        %v2282 = vadd.f32 %v2239, 1.0
        %v2283 = vadd.f32 %v2241, 1.0
        %v2284 = vadd.f32 %v2243, 1.0
        %v2285 = vadd.f32 %v2245, 1.0
        %v2286 = vadd.f32 %v2247, 1.0
        %v2287 = vadd.f32 %v2249, 1.0
        %v2288 = vadd.f32 %v2251, 1.0
        %v2289 = vadd.f32 %v2253, 1.0
        %v2290 = vadd.f32 %v2255, 1.0
        %v2291 = vadd.f32 %v2257, 1.0
        %v2292 = vadd.f32 %v2259, 1.0
        %v2293 = vadd.f32 %v2261, 1.0
        %v2294 = vrcp.pop %v2262
        %v2295 = vmul.f32 1.0, %v2294
        %v2296 = vrcp.pop %v2263
        %v2297 = vmul.f32 1.0, %v2296
        %v2298 = vrcp.pop %v2264
        %v2299 = vmul.f32 1.0, %v2298
        %v2300 = vrcp.pop %v2265
        %v2301 = vmul.f32 1.0, %v2300
        %v2302 = vrcp.pop %v2266
        %v2303 = vmul.f32 1.0, %v2302
        %v2304 = vrcp.pop %v2267
        %v2305 = vmul.f32 1.0, %v2304
        %v2306 = vrcp.pop %v2268
        %v2307 = vmul.f32 1.0, %v2306
        %v2308 = vrcp.pop %v2269
        %v2309 = vmul.f32 1.0, %v2308
        %v2310 = vrcp.pop %v2270
        %v2311 = vmul.f32 1.0, %v2310
        %v2312 = vrcp.pop %v2271
        %v2313 = vmul.f32 1.0, %v2312
        %v2314 = vrcp.pop %v2272
        %v2315 = vmul.f32 1.0, %v2314
        %v2316 = vrcp.pop %v2273
        %v2317 = vmul.f32 1.0, %v2316
        %v2318 = vrcp.pop %v2274
        %v2319 = vmul.f32 1.0, %v2318
        %v2320 = vrcp.pop %v2275
        %v2321 = vmul.f32 1.0, %v2320
        %v2322 = vrcp.pop %v2276
        %v2323 = vmul.f32 1.0, %v2322
        %v2324 = vrcp.pop %v2277
        %v2325 = vmul.f32 1.0, %v2324
        %v2326 = vrcp.pop %v2278
        %v2327 = vmul.f32 1.0, %v2326
        %v2328 = vrcp.pop %v2279
        %v2329 = vmul.f32 1.0, %v2328
        %v2330 = vrcp.pop %v2280
        %v2331 = vmul.f32 1.0, %v2330
        %v2332 = vrcp.pop %v2281
        %v2333 = vmul.f32 1.0, %v2332
        %v2334 = vrcp.pop %v2282
        %v2335 = vmul.f32 1.0, %v2334
        %v2336 = vrcp.pop %v2283
        %v2337 = vmul.f32 1.0, %v2336
        %v2338 = vrcp.pop %v2284
        %v2339 = vmul.f32 1.0, %v2338
        %v2340 = vrcp.pop %v2285
        %v2341 = vmul.f32 1.0, %v2340
        %v2342 = vrcp.pop %v2286
        %v2343 = vmul.f32 1.0, %v2342
        %v2344 = vrcp.pop %v2287
        %v2345 = vmul.f32 1.0, %v2344
        %v2346 = vrcp.pop %v2288
        %v2347 = vmul.f32 1.0, %v2346
        %v2348 = vrcp.pop %v2289
        %v2349 = vmul.f32 1.0, %v2348
        %v2350 = vrcp.pop %v2290
        %v2351 = vmul.f32 1.0, %v2350
        %v2352 = vrcp.pop %v2291
        %v2353 = vmul.f32 1.0, %v2352
        %v2354 = vrcp.pop %v2292
        %v2355 = vmul.f32 1.0, %v2354
        %v2356 = vrcp.pop %v2293
        %v2357 = vmul.f32 1.0, %v2356
        %v2358 = vsub.f32 1.0, %v2295
        %v2359 = vsub.f32 1.0, %v2297
        %v2360 = vsub.f32 1.0, %v2299
        %v2361 = vsub.f32 1.0, %v2301
        %v2362 = vsub.f32 1.0, %v2303
        %v2363 = vsub.f32 1.0, %v2305
        %v2364 = vsub.f32 1.0, %v2307
        %v2365 = vsub.f32 1.0, %v2309
        %v2366 = vsub.f32 1.0, %v2311
        %v2367 = vsub.f32 1.0, %v2313
        %v2368 = vsub.f32 1.0, %v2315
        %v2369 = vsub.f32 1.0, %v2317
        %v2370 = vsub.f32 1.0, %v2319
        %v2371 = vsub.f32 1.0, %v2321
        %v2372 = vsub.f32 1.0, %v2323
        %v2373 = vsub.f32 1.0, %v2325
        %v2374 = vsub.f32 1.0, %v2327
        %v2375 = vsub.f32 1.0, %v2329
        %v2376 = vsub.f32 1.0, %v2331
        %v2377 = vsub.f32 1.0, %v2333
        %v2378 = vsub.f32 1.0, %v2335
        %v2379 = vsub.f32 1.0, %v2337
        %v2380 = vsub.f32 1.0, %v2339
        %v2381 = vsub.f32 1.0, %v2341
        %v2382 = vsub.f32 1.0, %v2343
        %v2383 = vsub.f32 1.0, %v2345
        %v2384 = vsub.f32 1.0, %v2347
        %v2385 = vsub.f32 1.0, %v2349
        %v2386 = vsub.f32 1.0, %v2351
        %v2387 = vsub.f32 1.0, %v2353
        %v2388 = vsub.f32 1.0, %v2355
        %v2389 = vsub.f32 1.0, %v2357
        %v2390 = vadd.f32 %v2039, %v2295
        %v2391 = vadd.f32 %v2041, %v2297
        %v2392 = vadd.f32 %v2043, %v2299
        %v2393 = vadd.f32 %v2045, %v2301
        %v2394 = vadd.f32 %v2047, %v2303
        %v2395 = vadd.f32 %v2049, %v2305
        %v2396 = vadd.f32 %v2051, %v2307
        %v2397 = vadd.f32 %v2053, %v2309
        %v2398 = vadd.f32 %v2055, %v2311
        %v2399 = vadd.f32 %v2057, %v2313
        %v2400 = vadd.f32 %v2059, %v2315
        %v2401 = vadd.f32 %v2061, %v2317
        %v2402 = vadd.f32 %v2063, %v2319
        %v2403 = vadd.f32 %v2065, %v2321
        %v2404 = vadd.f32 %v2067, %v2323
        %v2405 = vadd.f32 %v2069, %v2325
        %v2406 = vadd.f32 %v2071, %v2327
        %v2407 = vadd.f32 %v2073, %v2329
        %v2408 = vadd.f32 %v2075, %v2331
        %v2409 = vadd.f32 %v2077, %v2333
        %v2410 = vadd.f32 %v2079, %v2335
        %v2411 = vadd.f32 %v2081, %v2337
        %v2412 = vadd.f32 %v2083, %v2339
        %v2413 = vadd.f32 %v2085, %v2341
        %v2414 = vadd.f32 %v2087, %v2343
        %v2415 = vadd.f32 %v2089, %v2345
        %v2416 = vadd.f32 %v2091, %v2347
        %v2417 = vadd.f32 %v2093, %v2349
        %v2418 = vadd.f32 %v2095, %v2351
        %v2419 = vadd.f32 %v2097, %v2353
        %v2420 = vadd.f32 %v2099, %v2355
        %v2421 = vadd.f32 %v2101, %v2357
        %v2422 = vmul.f32 %v2390, %v726
        %v2423 = vmul.f32 %v2391, %v731
        %v2424 = vmul.f32 %v2392, %v736
        %v2425 = vmul.f32 %v2393, %v741
        %v2426 = vmul.f32 %v2394, %v746
        %v2427 = vmul.f32 %v2395, %v751
        %v2428 = vmul.f32 %v2396, %v756
        %v2429 = vmul.f32 %v2397, %v761
        %v2430 = vmul.f32 %v2398, %v766
        %v2431 = vmul.f32 %v2399, %v771
        %v2432 = vmul.f32 %v2400, %v776
        %v2433 = vmul.f32 %v2401, %v781
        %v2434 = vmul.f32 %v2402, %v786
        %v2435 = vmul.f32 %v2403, %v791
        %v2436 = vmul.f32 %v2404, %v796
        %v2437 = vmul.f32 %v2405, %v801
        %v2438 = vmul.f32 %v2406, %v806
        %v2439 = vmul.f32 %v2407, %v811
        %v2440 = vmul.f32 %v2408, %v816
        %v2441 = vmul.f32 %v2409, %v821
        %v2442 = vmul.f32 %v2410, %v826
        %v2443 = vmul.f32 %v2411, %v831
        %v2444 = vmul.f32 %v2412, %v836
        %v2445 = vmul.f32 %v2413, %v841
        %v2446 = vmul.f32 %v2414, %v846
        %v2447 = vmul.f32 %v2415, %v851
        %v2448 = vmul.f32 %v2416, %v856
        %v2449 = vmul.f32 %v2417, %v861
        %v2450 = vmul.f32 %v2418, %v866
        %v2451 = vmul.f32 %v2419, %v871
        %v2452 = vmul.f32 %v2420, %v876
        %v2453 = vmul.f32 %v2421, %v881
        %v2454 = vadd.f32 %v2102, %v2358
        %v2455 = vadd.f32 %v2103, %v2359
        %v2456 = vadd.f32 %v2104, %v2360
        %v2457 = vadd.f32 %v2105, %v2361
        %v2458 = vadd.f32 %v2106, %v2362
        %v2459 = vadd.f32 %v2107, %v2363
        %v2460 = vadd.f32 %v2108, %v2364
        %v2461 = vadd.f32 %v2109, %v2365
        %v2462 = vadd.f32 %v2110, %v2366
        %v2463 = vadd.f32 %v2111, %v2367
        %v2464 = vadd.f32 %v2112, %v2368
        %v2465 = vadd.f32 %v2113, %v2369
        %v2466 = vadd.f32 %v2114, %v2370
        %v2467 = vadd.f32 %v2115, %v2371
        %v2468 = vadd.f32 %v2116, %v2372
        %v2469 = vadd.f32 %v2117, %v2373
        %v2470 = vadd.f32 %v2118, %v2374
        %v2471 = vadd.f32 %v2119, %v2375
        %v2472 = vadd.f32 %v2120, %v2376
        %v2473 = vadd.f32 %v2121, %v2377
        %v2474 = vadd.f32 %v2122, %v2378
        %v2475 = vadd.f32 %v2123, %v2379
        %v2476 = vadd.f32 %v2124, %v2380
        %v2477 = vadd.f32 %v2125, %v2381
        %v2478 = vadd.f32 %v2126, %v2382
        %v2479 = vadd.f32 %v2127, %v2383
        %v2480 = vadd.f32 %v2128, %v2384
        %v2481 = vadd.f32 %v2129, %v2385
        %v2482 = vadd.f32 %v2130, %v2386
        %v2483 = vadd.f32 %v2131, %v2387
        %v2484 = vadd.f32 %v2132, %v2388
        %v2485 = vadd.f32 %v2133, %v2389
        %v2486 = vmul.f32 %v2454, %v1208
        %v2487 = vmul.f32 %v2455, %v1213
        %v2488 = vmul.f32 %v2456, %v1218
        %v2489 = vmul.f32 %v2457, %v1223
        %v2490 = vmul.f32 %v2458, %v1228
        %v2491 = vmul.f32 %v2459, %v1233
        %v2492 = vmul.f32 %v2460, %v1238
        %v2493 = vmul.f32 %v2461, %v1243
        %v2494 = vmul.f32 %v2462, %v1248
        %v2495 = vmul.f32 %v2463, %v1253
        %v2496 = vmul.f32 %v2464, %v1258
        %v2497 = vmul.f32 %v2465, %v1263
        %v2498 = vmul.f32 %v2466, %v1268
        %v2499 = vmul.f32 %v2467, %v1273
        %v2500 = vmul.f32 %v2468, %v1278
        %v2501 = vmul.f32 %v2469, %v1283
        %v2502 = vmul.f32 %v2470, %v1288
        %v2503 = vmul.f32 %v2471, %v1293
        %v2504 = vmul.f32 %v2472, %v1298
        %v2505 = vmul.f32 %v2473, %v1303
        %v2506 = vmul.f32 %v2474, %v1308
        %v2507 = vmul.f32 %v2475, %v1313
        %v2508 = vmul.f32 %v2476, %v1318
        %v2509 = vmul.f32 %v2477, %v1323
        %v2510 = vmul.f32 %v2478, %v1328
        %v2511 = vmul.f32 %v2479, %v1333
        %v2512 = vmul.f32 %v2480, %v1338
        %v2513 = vmul.f32 %v2481, %v1343
        %v2514 = vmul.f32 %v2482, %v1348
        %v2515 = vmul.f32 %v2483, %v1353
        %v2516 = vmul.f32 %v2484, %v1358
        %v2517 = vmul.f32 %v2485, %v1363
        %v2518 = vadd.f32 %v2422, %v2486
        %v2519 = vadd.f32 %v2423, %v2487
        %v2520 = vadd.f32 %v2424, %v2488
        %v2521 = vadd.f32 %v2425, %v2489
        %v2522 = vadd.f32 %v2426, %v2490
        %v2523 = vadd.f32 %v2427, %v2491
        %v2524 = vadd.f32 %v2428, %v2492
        %v2525 = vadd.f32 %v2429, %v2493
        %v2526 = vadd.f32 %v2430, %v2494
        %v2527 = vadd.f32 %v2431, %v2495
        %v2528 = vadd.f32 %v2432, %v2496
        %v2529 = vadd.f32 %v2433, %v2497
        %v2530 = vadd.f32 %v2434, %v2498
        %v2531 = vadd.f32 %v2435, %v2499
        %v2532 = vadd.f32 %v2436, %v2500
        %v2533 = vadd.f32 %v2437, %v2501
        %v2534 = vadd.f32 %v2438, %v2502
        %v2535 = vadd.f32 %v2439, %v2503
        %v2536 = vadd.f32 %v2440, %v2504
        %v2537 = vadd.f32 %v2441, %v2505
        %v2538 = vadd.f32 %v2442, %v2506
        %v2539 = vadd.f32 %v2443, %v2507
        %v2540 = vadd.f32 %v2444, %v2508
        %v2541 = vadd.f32 %v2445, %v2509
        %v2542 = vadd.f32 %v2446, %v2510
        %v2543 = vadd.f32 %v2447, %v2511
        %v2544 = vadd.f32 %v2448, %v2512
        %v2545 = vadd.f32 %v2449, %v2513
        %v2546 = vadd.f32 %v2450, %v2514
        %v2547 = vadd.f32 %v2451, %v2515
        %v2548 = vadd.f32 %v2452, %v2516
        %v2549 = vadd.f32 %v2453, %v2517
        %2550 = vst [vmem:[%s269] sm:$0xff] %v2518
        %2551 = vst [vmem:[%s269 + $0x8] sm:$0xff] %v2519
        %2552 = vst [vmem:[%s269 + $0x10] sm:$0xff] %v2520
        %2553 = vst [vmem:[%s269 + $0x18] sm:$0xff] %v2521
        %2554 = vst [vmem:[%s269 + $0x20] sm:$0xff] %v2522
        %2555 = vst [vmem:[%s269 + $0x28] sm:$0xff] %v2523
        %2556 = vst [vmem:[%s269 + $0x30] sm:$0xff] %v2524
        %2557 = vst [vmem:[%s269 + $0x38] sm:$0xff] %v2525
        %2558 = vst [vmem:[%s269 + $0x40] sm:$0xff] %v2526
        %2559 = vst [vmem:[%s269 + $0x48] sm:$0xff] %v2527
        %2560 = vst [vmem:[%s269 + $0x50] sm:$0xff] %v2528
        %2561 = vst [vmem:[%s269 + $0x58] sm:$0xff] %v2529
        %2562 = vst [vmem:[%s269 + $0x60] sm:$0xff] %v2530
        %2563 = vst [vmem:[%s269 + $0x68] sm:$0xff] %v2531
        %2564 = vst [vmem:[%s269 + $0x70] sm:$0xff] %v2532
        %2565 = vst [vmem:[%s269 + $0x78] sm:$0xff] %v2533
        %2566 = vst [vmem:[%s269 + $0x80] sm:$0xff] %v2534
        %2567 = vst [vmem:[%s269 + $0x88] sm:$0xff] %v2535
        %2568 = vst [vmem:[%s269 + $0x90] sm:$0xff] %v2536
        %2569 = vst [vmem:[%s269 + $0x98] sm:$0xff] %v2537
        %2570 = vst [vmem:[%s269 + $0xa0] sm:$0xff] %v2538
        %2571 = vst [vmem:[%s269 + $0xa8] sm:$0xff] %v2539
        %2572 = vst [vmem:[%s269 + $0xb0] sm:$0xff] %v2540
        %2573 = vst [vmem:[%s269 + $0xb8] sm:$0xff] %v2541
        %2574 = vst [vmem:[%s269 + $0xc0] sm:$0xff] %v2542
        %2575 = vst [vmem:[%s269 + $0xc8] sm:$0xff] %v2543
        %2576 = vst [vmem:[%s269 + $0xd0] sm:$0xff] %v2544
        %2577 = vst [vmem:[%s269 + $0xd8] sm:$0xff] %v2545
        %2578 = vst [vmem:[%s269 + $0xe0] sm:$0xff] %v2546
        %2579 = vst [vmem:[%s269 + $0xe8] sm:$0xff] %v2547
        %2580 = vst [vmem:[%s269 + $0xf0] sm:$0xff] %v2548
        %2581 = vst [vmem:[%s269 + $0xf8] sm:$0xff] %v2549
        %s2582 = sand.u32 %s126, 1
        %s2583 = scalar_lea.sflag [#allocation4], %s2582
        %s2584 = sand.u32 %s126, 1
        %s2585 = smul.addr %s2584, 256
        %s2586 = scalar_lea.vmem [#allocation8], %s2585
        // Predicated region
        $region49: #{tpu_custom_call.1} parent=35 // pred_check
          %p2587 = pneg %p136
        $region50: #{tpu_custom_call.1} parent=35 // pred_check_branch
          %2589 = sbr.rel (%p2587) target = $region52
        $region51: #{tpu_custom_call.1} parent=35 // pred_region
          %s2590 = smul.u32 32, %s24
          %s2592 = ssub.s32 4096, 4096
          %2593 = vsyncadd %s2583, %s2592
          %s2594 = smul.addr %s2590, 128
          %s2595 = scalar_lea.hbm %s4, %s2594
          %s2596 = sshll.u32 %s2586, 4
          %s2597 = int_to_ptr.vmem [resolvable:$true] %s2596
          %2602 = dma.vmem_to_hbm [thread:$0]  %s2597, 4096, %s2595, %s2583, 128, 128, 8
        $region52: #{tpu_custom_call.1} parent=35 // pred_fallthru
          _
      $region36: #{tpu_custom_call.1} parent=5 // pred_fallthru
        _
      %p2603 = scmp.le.s32.totalorder 2, %s19
      // Predicated region
      $region53: #{tpu_custom_call.1} parent=5 // pred_check
        %p2604 = pneg %p2603
      $region54: #{tpu_custom_call.1} parent=5 // pred_check_branch
        %2606 = sbr.rel (%p2604) target = $region56
      $region55: #{tpu_custom_call.1} parent=5 // pred_region
        %s2607 = ssub.s32 %s19, 2
        // Predicated region
        $region57: #{tpu_custom_call.1} parent=55 // pred_check
          %p2608 = pneg %p142
        $region58: #{tpu_custom_call.1} parent=55 // pred_check_branch
          %2610 = sbr.rel (%p2608) target = $region60
        $region59: #{tpu_custom_call.1} parent=55 // pred_region
          %s2611 = sand.u32 %s127, 1
          %s2612 = scalar_lea.sflag [#allocation4], %s2611
          %s2613 = sand.u32 %s127, 1
          %s2614 = smul.addr %s2613, 256
          %s2615 = scalar_lea.vmem [#allocation8], %s2614
          %2616 = dma.done %s2612, 4096
        $region60: #{tpu_custom_call.1} parent=55 // pred_fallthru
          _
      $region56: #{tpu_custom_call.1} parent=5 // pred_fallthru
        _
    $region6: #{tpu_custom_call.1} parent=1 // loop_footer
      %s23 = sadd.s32 1, %s19
    $region7: #{tpu_custom_call.1} parent=1 // loop_footer_branch
      %18 = sbr.rel target = $region3
    $region8: #{tpu_custom_call.1} parent=1 // loop_exit
      _
    %2617 = vsyncpa [#allocation3], 1
    %s2618 = scalar_lea.sflag [#allocation3], 1
    %2619 = vsyncpa %s2618, 1
    %2620 = vsyncpa [#allocation6], 1
    %s2621 = scalar_lea.sflag [#allocation6], 1
    %2622 = vsyncpa %s2621, 1
    %2623 = vsyncpa [#allocation4], 1
    %s2624 = scalar_lea.sflag [#allocation4], 1
    %2625 = vsyncpa %s2624, 1

</llo_original>
